<compile_context>
chip_gen: v5e
topology: v5e:2x2
jax: 0.10.0
libtpu: 0.0.40
codegen_flags: <defaults>
</compile_context>

<pallas_src>
import functools

import jax
import jax.numpy as jnp
from jax.experimental import pallas as pl
from jax.experimental.pallas import tpu as pltpu

_BN_EPS = 1e-5


def _wnet_output_kernel(
    x_ref,      # (C_in, H, LN) f32 VMEM, lane = n*W + w  (lanes >= N*W are zero pad)
    p_ref,      # flat f32 SMEM parameter array
    out_ref,    # (H, C_out*LN) f32 VMEM, lane = c*LN + n*W + w
    *, N, C_in, C_mid, C_out, H, W, LN,
):
    NW = N * W
    H1, W1 = H - 2, W - 2                    # spatial size after a VALID 3x3 conv
    inv_count = 1.0 / float(N * H1 * W1)     # BN normalizer as a Python constant

    # Static offsets into the packed SMEM parameter array.
    off = 0
    w1_off = off; off += C_mid * C_in * 9
    b1_off = off; off += C_mid
    g1_off = off; off += C_mid
    be1_off = off; off += C_mid
    w2_off = off; off += C_mid * C_mid * 9
    b2_off = off; off += C_mid
    g2_off = off; off += C_mid
    be2_off = off; off += C_mid
    w3_off = off; off += C_out * C_mid
    b3_off = off; off += C_out

    # Per-lane masks, built and broadcast exactly once.
    lane = jax.lax.broadcasted_iota(jnp.int32, (1, LN), 1)
    w_idx = lane % W                                       # w within a sample segment
    col_valid = jnp.broadcast_to(
        jnp.logical_and(lane < NW, w_idx < W1), (H1, LN))  # valid conv-output lanes
    is_w0 = jnp.broadcast_to(w_idx == 0, (H, LN))
    is_wlast = jnp.broadcast_to(w_idx == (W - 1), (H, LN))

    def shift_left(v, j):
        """v[:, l] -> v[:, l + j] (circular XLU rotate).  Wrap-around only lands
        in junk lanes (w >= W1 or lane >= N*W)."""
        return v if j == 0 else pltpu.roll(v, LN - j, axis=1)

    def conv3x3(planes, c_in, c_out, w_off, b_off):
        """3x3 VALID conv, tap-major: 1 live tap + c_out live accumulators."""
        accs = [None] * c_out
        for ci in range(c_in):
            plane = planes[ci]                             # (H, LN)
            for j in range(3):
                shifted = shift_left(plane, j)             # one vrot per (ci, j)
                for i in range(3):
                    tap = shifted[i:i + H1, :]             # (H1, LN)
                    for co in range(c_out):
                        w = p_ref[w_off + ((co * c_in + ci) * 3 + i) * 3 + j]
                        term = tap * w
                        accs[co] = term if accs[co] is None else accs[co] + term
        return [accs[co] + p_ref[b_off + co] for co in range(c_out)]

    def bn_relu(acc, g, be):
        """Training-mode BatchNorm2d (batch stats, biased var) + ReLU on (H1, LN)."""
        # TODO(synk): E[x^2]-E[x]^2 in f32 is fine at these magnitudes; use a
        # centered two-pass form if the block is scaled to large activations.
        a = jnp.where(col_valid, acc, 0.0)                 # zero junk lanes before stats
        s = jnp.sum(jnp.sum(a, axis=1, keepdims=True), axis=0, keepdims=True)
        sq = jnp.sum(jnp.sum(a * a, axis=1, keepdims=True), axis=0, keepdims=True)
        mean = s * inv_count
        var = sq * inv_count - mean * mean                 # biased variance
        scale = g * jax.lax.rsqrt(var + _BN_EPS)
        shift = be - mean * scale
        return jnp.maximum(acc * scale + shift, 0.0)

    def rep_pad(y):
        """ReplicationPad2d(1), in-register: (H1, LN) valid data -> (H, LN)."""
        rp = jnp.concatenate([y[0:1, :], y, y[H1 - 1:H1, :]], axis=0)   # row padding
        r1 = pltpu.roll(rp, 1, axis=1)                     # rp[:, l-1]
        r2 = pltpu.roll(rp, 2, axis=1)                     # rp[:, l-2]
        # w == 0 -> original column 0; w == W-1 -> column W1-1; else previous column.
        return jnp.where(is_w0, rp, jnp.where(is_wlast, r2, r1))

    # ---- stage 1: conv3x3 -> BN -> ReLU -> replication pad ---------------------
    x_planes = [x_ref[ci] for ci in range(C_in)]
    a1 = conv3x3(x_planes, C_in, C_mid, w1_off, b1_off)
    p1 = [rep_pad(bn_relu(a1[co], p_ref[g1_off + co], p_ref[be1_off + co]))
          for co in range(C_mid)]

    # ---- stage 2: conv3x3 -> BN -> ReLU -> replication pad ---------------------
    a2 = conv3x3(p1, C_mid, C_mid, w2_off, b2_off)
    p2 = [rep_pad(bn_relu(a2[co], p_ref[g2_off + co], p_ref[be2_off + co]))
          for co in range(C_mid)]

    # ---- stage 3: 1x1 conv to classes, single lane-dense 128-aligned store -----
    outs = []
    for c in range(C_out):
        acc = p2[0] * p_ref[w3_off + c * C_mid]
        for cm in range(1, C_mid):
            acc = acc + p2[cm] * p_ref[w3_off + c * C_mid + cm]
        outs.append(acc + p_ref[b3_off + c])
    out_ref[...] = jnp.concatenate(outs, axis=1)           # (H, C_out*LN), one vst


def wnet_output_block(x, params):
    N, C_in, H, W = x.shape
    C_mid = params["w1"].shape[0]
    C_out = params["w3"].shape[0]
    assert H >= 3 and W >= 3
    NW = N * W
    LN = max(128, ((NW + 127) // 128) * 128)   # lane dim padded to a vreg multiple

    kernel = functools.partial(
        _wnet_output_kernel,
        N=N, C_in=C_in, C_mid=C_mid, C_out=C_out, H=H, W=W, LN=LN)

    def flat(a):
        return a.reshape(-1).astype(jnp.float32)

    # All parameters packed into one flat SMEM array (single operand).
    p_flat = jnp.concatenate([
        flat(params["w1"]), flat(params["b1"]), flat(params["g1"]), flat(params["be1"]),
        flat(params["w2"]), flat(params["b2"]), flat(params["g2"]), flat(params["be2"]),
        flat(params["w3"]), flat(params["b3"]),
    ])

    # Wrapper-side layout plumbing (XLA): lane-pack the batch dim, pad lanes to 128.
    #   x_k[ci, h, n*W + w] = x[n, ci, h, w]
    # TODO(synk): at realistic sizes do this via an input index_map / in-kernel DMA
    # instead of an XLA transpose (halves HBM traffic of a mem-bound block).
    x_k = x.astype(jnp.float32).transpose(1, 2, 0, 3).reshape(C_in, H, NW)
    if LN != NW:
        x_k = jnp.pad(x_k, ((0, 0), (0, 0), (0, LN - NW)))

    out_k = pl.pallas_call(
        kernel,
        out_shape=jax.ShapeDtypeStruct((H, C_out * LN), jnp.float32),
        in_specs=[pl.BlockSpec(memory_space=pltpu.MemorySpace.VMEM),
                  pl.BlockSpec(memory_space=pltpu.MemorySpace.SMEM)],
        out_specs=pl.BlockSpec(memory_space=pltpu.MemorySpace.VMEM),
    )(x_k, p_flat)

    # out_k[h, c*LN + n*W + w] = out[n, c, h, w]
    out = out_k.reshape(H, C_out, LN)[:, :, :NW].reshape(H, C_out, N, W)
    return out.transpose(2, 1, 0, 3)


def _reference(x, p):
    """Pure-JAX reference mirroring the PyTorch module in training mode."""
    def conv(x, w, b):
        y = jax.lax.conv_general_dilated(
            x, w, window_strides=(1, 1), padding="VALID",
            dimension_numbers=("NCHW", "OIHW", "NCHW"))
        return y + b[None, :, None, None]

    def bn_train(x, g, be):
        mean = jnp.mean(x, axis=(0, 2, 3), keepdims=True)
        var = jnp.mean((x - mean) ** 2, axis=(0, 2, 3), keepdims=True)
        xn = (x - mean) / jnp.sqrt(var + _BN_EPS)
        return xn * g[None, :, None, None] + be[None, :, None, None]

    def rep(x):
        return jnp.pad(x, ((0, 0), (0, 0), (1, 1), (1, 1)), mode="edge")

    y = rep(jax.nn.relu(bn_train(conv(x, p["w1"], p["b1"]), p["g1"], p["be1"])))
    y = rep(jax.nn.relu(bn_train(conv(y, p["w2"], p["b2"]), p["g2"], p["be2"])))
    return conv(y, p["w3"], p["b3"])


if __name__ == "__main__":
    in_features, num_classes = 4, 3
    mid = in_features // 2
    N, H, W = 2, 16, 16

    key = jax.random.PRNGKey(0)
    keys = jax.random.split(key, 11)
    p = {
        "w1": 0.3 * jax.random.normal(keys[0], (mid, in_features, 3, 3), jnp.float32),
        "b1": 0.1 * jax.random.normal(keys[1], (mid,), jnp.float32),
        "g1": 1.0 + 0.1 * jax.random.normal(keys[2], (mid,), jnp.float32),
        "be1": 0.1 * jax.random.normal(keys[3], (mid,), jnp.float32),
        "w2": 0.3 * jax.random.normal(keys[4], (mid, mid, 3, 3), jnp.float32),
        "b2": 0.1 * jax.random.normal(keys[5], (mid,), jnp.float32),
        "g2": 1.0 + 0.1 * jax.random.normal(keys[6], (mid,), jnp.float32),
        "be2": 0.1 * jax.random.normal(keys[7], (mid,), jnp.float32),
        "w3": 0.3 * jax.random.normal(keys[8], (num_classes, mid, 1, 1), jnp.float32),
        "b3": 0.1 * jax.random.normal(keys[9], (num_classes,), jnp.float32),
    }
    x = jax.random.normal(keys[10], (N, in_features, H, W), jnp.float32)

    out = jax.block_until_ready(wnet_output_block(x, p))
    assert out.shape == (N, num_classes, H, W)

    ref = _reference(x, p)
    max_err = float(jnp.max(jnp.abs(out - ref)))
    if max_err > 1e-3:
        raise AssertionError(f"mismatch vs reference: max abs err {max_err}")
    print("KERNEL_OK")
</pallas_src>

<mosaic_0001>
module attributes {stable_mosaic.version = 11 : i64} {
  func.func @_wnet_output_kernel(%arg0: memref<4x16x128xf32, #tpu.memory_space<vmem>>, %arg1: memref<129xf32, #tpu.memory_space<smem>>, %arg2: memref<16x384xf32, #tpu.memory_space<vmem>>) attributes {dimension_semantics = [], scalar_prefetch = 0 : i64, scratch_operands = 0 : i64, tpu.core_type = #tpu.core_type<tc>} {
    %0 = tpu.iota {dimensions = array<i32: 1>} : vector<1x128xi32>
    %c16_i32 = arith.constant 16 : i32
    %c0_i32 = arith.constant 0 : i32
    %1 = arith.cmpi eq, %c16_i32, %c0_i32 : i32
    %c1_i32 = arith.constant 1 : i32
    %2 = arith.select %1, %c1_i32, %c16_i32 : i32
    %3 = vector.broadcast %2 : i32 to vector<1x128xi32>
    %4 = arith.remsi %0, %3 : vector<1x128xi32>
    %c0_i32_0 = arith.constant 0 : i32
    %5 = vector.broadcast %c0_i32_0 : i32 to vector<1x128xi32>
    %6 = arith.cmpi ne, %4, %5 : vector<1x128xi32>
    %c0_i32_1 = arith.constant 0 : i32
    %7 = vector.broadcast %c0_i32_1 : i32 to vector<1x128xi32>
    %8 = arith.cmpi slt, %4, %7 : vector<1x128xi32>
    %c0_i32_2 = arith.constant 0 : i32
    %9 = arith.cmpi slt, %2, %c0_i32_2 : i32
    %10 = vector.broadcast %9 : i1 to vector<1x128xi1>
    %11 = vector.broadcast %10 : vector<1x128xi1> to vector<1x128xi1>
    %12 = arith.xori %8, %11 : vector<1x128xi1>
    %13 = arith.andi %12, %6 : vector<1x128xi1>
    %14 = vector.broadcast %2 : i32 to vector<1x128xi32>
    %15 = arith.addi %4, %14 : vector<1x128xi32>
    %16 = arith.select %13, %15, %4 : vector<1x128xi1>, vector<1x128xi32>
    %c32_i32 = arith.constant 32 : i32
    %17 = vector.broadcast %c32_i32 : i32 to vector<1x128xi32>
    %18 = arith.cmpi slt, %0, %17 : vector<1x128xi32>
    %c14_i32 = arith.constant 14 : i32
    %19 = vector.broadcast %c14_i32 : i32 to vector<1x128xi32>
    %20 = arith.cmpi slt, %16, %19 : vector<1x128xi32>
    %21 = arith.andi %18, %20 : vector<1x128xi1>
    %22 = vector.shape_cast %21 : vector<1x128xi1> to vector<1x128xi1>
    %23 = vector.broadcast %22 : vector<1x128xi1> to vector<14x128xi1>
    %c0_i32_3 = arith.constant 0 : i32
    %24 = vector.broadcast %c0_i32_3 : i32 to vector<1x128xi32>
    %25 = arith.cmpi eq, %16, %24 : vector<1x128xi32>
    %26 = vector.shape_cast %25 : vector<1x128xi1> to vector<1x128xi1>
    %27 = vector.broadcast %26 : vector<1x128xi1> to vector<16x128xi1>
    %c15_i32 = arith.constant 15 : i32
    %28 = vector.broadcast %c15_i32 : i32 to vector<1x128xi32>
    %29 = arith.cmpi eq, %16, %28 : vector<1x128xi32>
    %30 = vector.shape_cast %29 : vector<1x128xi1> to vector<1x128xi1>
    %31 = vector.broadcast %30 : vector<1x128xi1> to vector<16x128xi1>
    %c0 = arith.constant 0 : index
    %c0_4 = arith.constant 0 : index
    %c0_5 = arith.constant 0 : index
    %32 = vector.load %arg0[%c0, %c0_4, %c0_5] : memref<4x16x128xf32, #tpu.memory_space<vmem>>, vector<1x16x128xf32>
    %33 = vector.shape_cast %32 : vector<1x16x128xf32> to vector<16x128xf32>
    %c1 = arith.constant 1 : index
    %c0_6 = arith.constant 0 : index
    %c0_7 = arith.constant 0 : index
    %34 = vector.load %arg0[%c1, %c0_6, %c0_7] : memref<4x16x128xf32, #tpu.memory_space<vmem>>, vector<1x16x128xf32>
    %35 = vector.shape_cast %34 : vector<1x16x128xf32> to vector<16x128xf32>
    %c2 = arith.constant 2 : index
    %c0_8 = arith.constant 0 : index
    %c0_9 = arith.constant 0 : index
    %36 = vector.load %arg0[%c2, %c0_8, %c0_9] : memref<4x16x128xf32, #tpu.memory_space<vmem>>, vector<1x16x128xf32>
    %37 = vector.shape_cast %36 : vector<1x16x128xf32> to vector<16x128xf32>
    %c3 = arith.constant 3 : index
    %c0_10 = arith.constant 0 : index
    %c0_11 = arith.constant 0 : index
    %38 = vector.load %arg0[%c3, %c0_10, %c0_11] : memref<4x16x128xf32, #tpu.memory_space<vmem>>, vector<1x16x128xf32>
    %39 = vector.shape_cast %38 : vector<1x16x128xf32> to vector<16x128xf32>
    %40 = vector.extract_strided_slice %33 {offsets = [0, 0], sizes = [14, 128], strides = [1, 1]} : vector<16x128xf32> to vector<14x128xf32>
    %c0_12 = arith.constant 0 : index
    %41 = memref.load %arg1[%c0_12] : memref<129xf32, #tpu.memory_space<smem>>
    %42 = vector.broadcast %41 : f32 to vector<14x128xf32>
    %43 = arith.mulf %40, %42 : vector<14x128xf32>
    %c36 = arith.constant 36 : index
    %44 = memref.load %arg1[%c36] : memref<129xf32, #tpu.memory_space<smem>>
    %45 = vector.broadcast %44 : f32 to vector<14x128xf32>
    %46 = arith.mulf %40, %45 : vector<14x128xf32>
    %47 = vector.extract_strided_slice %33 {offsets = [1, 0], sizes = [14, 128], strides = [1, 1]} : vector<16x128xf32> to vector<14x128xf32>
    %c3_13 = arith.constant 3 : index
    %48 = memref.load %arg1[%c3_13] : memref<129xf32, #tpu.memory_space<smem>>
    %49 = vector.broadcast %48 : f32 to vector<14x128xf32>
    %50 = arith.mulf %47, %49 : vector<14x128xf32>
    %51 = arith.addf %43, %50 : vector<14x128xf32>
    %c39 = arith.constant 39 : index
    %52 = memref.load %arg1[%c39] : memref<129xf32, #tpu.memory_space<smem>>
    %53 = vector.broadcast %52 : f32 to vector<14x128xf32>
    %54 = arith.mulf %47, %53 : vector<14x128xf32>
    %55 = arith.addf %46, %54 : vector<14x128xf32>
    %56 = vector.extract_strided_slice %33 {offsets = [2, 0], sizes = [14, 128], strides = [1, 1]} : vector<16x128xf32> to vector<14x128xf32>
    %c6 = arith.constant 6 : index
    %57 = memref.load %arg1[%c6] : memref<129xf32, #tpu.memory_space<smem>>
    %58 = vector.broadcast %57 : f32 to vector<14x128xf32>
    %59 = arith.mulf %56, %58 : vector<14x128xf32>
    %60 = arith.addf %51, %59 : vector<14x128xf32>
    %c42 = arith.constant 42 : index
    %61 = memref.load %arg1[%c42] : memref<129xf32, #tpu.memory_space<smem>>
    %62 = vector.broadcast %61 : f32 to vector<14x128xf32>
    %63 = arith.mulf %56, %62 : vector<14x128xf32>
    %64 = arith.addf %55, %63 : vector<14x128xf32>
    %c127_i32 = arith.constant 127 : i32
    %65 = tpu.dynamic_rotate %33 by %c127_i32 dim 1 : vector<16x128xf32>, i32 -> vector<16x128xf32>
    %66 = vector.extract_strided_slice %65 {offsets = [0, 0], sizes = [14, 128], strides = [1, 1]} : vector<16x128xf32> to vector<14x128xf32>
    %c1_14 = arith.constant 1 : index
    %67 = memref.load %arg1[%c1_14] : memref<129xf32, #tpu.memory_space<smem>>
    %68 = vector.broadcast %67 : f32 to vector<14x128xf32>
    %69 = arith.mulf %66, %68 : vector<14x128xf32>
    %70 = arith.addf %60, %69 : vector<14x128xf32>
    %c37 = arith.constant 37 : index
    %71 = memref.load %arg1[%c37] : memref<129xf32, #tpu.memory_space<smem>>
    %72 = vector.broadcast %71 : f32 to vector<14x128xf32>
    %73 = arith.mulf %66, %72 : vector<14x128xf32>
    %74 = arith.addf %64, %73 : vector<14x128xf32>
    %75 = vector.extract_strided_slice %65 {offsets = [1, 0], sizes = [14, 128], strides = [1, 1]} : vector<16x128xf32> to vector<14x128xf32>
    %c4 = arith.constant 4 : index
    %76 = memref.load %arg1[%c4] : memref<129xf32, #tpu.memory_space<smem>>
    %77 = vector.broadcast %76 : f32 to vector<14x128xf32>
    %78 = arith.mulf %75, %77 : vector<14x128xf32>
    %79 = arith.addf %70, %78 : vector<14x128xf32>
    %c40 = arith.constant 40 : index
    %80 = memref.load %arg1[%c40] : memref<129xf32, #tpu.memory_space<smem>>
    %81 = vector.broadcast %80 : f32 to vector<14x128xf32>
    %82 = arith.mulf %75, %81 : vector<14x128xf32>
    %83 = arith.addf %74, %82 : vector<14x128xf32>
    %84 = vector.extract_strided_slice %65 {offsets = [2, 0], sizes = [14, 128], strides = [1, 1]} : vector<16x128xf32> to vector<14x128xf32>
    %c7 = arith.constant 7 : index
    %85 = memref.load %arg1[%c7] : memref<129xf32, #tpu.memory_space<smem>>
    %86 = vector.broadcast %85 : f32 to vector<14x128xf32>
    %87 = arith.mulf %84, %86 : vector<14x128xf32>
    %88 = arith.addf %79, %87 : vector<14x128xf32>
    %c43 = arith.constant 43 : index
    %89 = memref.load %arg1[%c43] : memref<129xf32, #tpu.memory_space<smem>>
    %90 = vector.broadcast %89 : f32 to vector<14x128xf32>
    %91 = arith.mulf %84, %90 : vector<14x128xf32>
    %92 = arith.addf %83, %91 : vector<14x128xf32>
    %c126_i32 = arith.constant 126 : i32
    %93 = tpu.dynamic_rotate %33 by %c126_i32 dim 1 : vector<16x128xf32>, i32 -> vector<16x128xf32>
    %94 = vector.extract_strided_slice %93 {offsets = [0, 0], sizes = [14, 128], strides = [1, 1]} : vector<16x128xf32> to vector<14x128xf32>
    %c2_15 = arith.constant 2 : index
    %95 = memref.load %arg1[%c2_15] : memref<129xf32, #tpu.memory_space<smem>>
    %96 = vector.broadcast %95 : f32 to vector<14x128xf32>
    %97 = arith.mulf %94, %96 : vector<14x128xf32>
    %98 = arith.addf %88, %97 : vector<14x128xf32>
    %c38 = arith.constant 38 : index
    %99 = memref.load %arg1[%c38] : memref<129xf32, #tpu.memory_space<smem>>
    %100 = vector.broadcast %99 : f32 to vector<14x128xf32>
    %101 = arith.mulf %94, %100 : vector<14x128xf32>
    %102 = arith.addf %92, %101 : vector<14x128xf32>
    %103 = vector.extract_strided_slice %93 {offsets = [1, 0], sizes = [14, 128], strides = [1, 1]} : vector<16x128xf32> to vector<14x128xf32>
    %c5 = arith.constant 5 : index
    %104 = memref.load %arg1[%c5] : memref<129xf32, #tpu.memory_space<smem>>
    %105 = vector.broadcast %104 : f32 to vector<14x128xf32>
    %106 = arith.mulf %103, %105 : vector<14x128xf32>
    %107 = arith.addf %98, %106 : vector<14x128xf32>
    %c41 = arith.constant 41 : index
    %108 = memref.load %arg1[%c41] : memref<129xf32, #tpu.memory_space<smem>>
    %109 = vector.broadcast %108 : f32 to vector<14x128xf32>
    %110 = arith.mulf %103, %109 : vector<14x128xf32>
    %111 = arith.addf %102, %110 : vector<14x128xf32>
    %112 = vector.extract_strided_slice %93 {offsets = [2, 0], sizes = [14, 128], strides = [1, 1]} : vector<16x128xf32> to vector<14x128xf32>
    %c8 = arith.constant 8 : index
    %113 = memref.load %arg1[%c8] : memref<129xf32, #tpu.memory_space<smem>>
    %114 = vector.broadcast %113 : f32 to vector<14x128xf32>
    %115 = arith.mulf %112, %114 : vector<14x128xf32>
    %116 = arith.addf %107, %115 : vector<14x128xf32>
    %c44 = arith.constant 44 : index
    %117 = memref.load %arg1[%c44] : memref<129xf32, #tpu.memory_space<smem>>
    %118 = vector.broadcast %117 : f32 to vector<14x128xf32>
    %119 = arith.mulf %112, %118 : vector<14x128xf32>
    %120 = arith.addf %111, %119 : vector<14x128xf32>
    %121 = vector.extract_strided_slice %35 {offsets = [0, 0], sizes = [14, 128], strides = [1, 1]} : vector<16x128xf32> to vector<14x128xf32>
    %c9 = arith.constant 9 : index
    %122 = memref.load %arg1[%c9] : memref<129xf32, #tpu.memory_space<smem>>
    %123 = vector.broadcast %122 : f32 to vector<14x128xf32>
    %124 = arith.mulf %121, %123 : vector<14x128xf32>
    %125 = arith.addf %116, %124 : vector<14x128xf32>
    %c45 = arith.constant 45 : index
    %126 = memref.load %arg1[%c45] : memref<129xf32, #tpu.memory_space<smem>>
    %127 = vector.broadcast %126 : f32 to vector<14x128xf32>
    %128 = arith.mulf %121, %127 : vector<14x128xf32>
    %129 = arith.addf %120, %128 : vector<14x128xf32>
    %130 = vector.extract_strided_slice %35 {offsets = [1, 0], sizes = [14, 128], strides = [1, 1]} : vector<16x128xf32> to vector<14x128xf32>
    %c12 = arith.constant 12 : index
    %131 = memref.load %arg1[%c12] : memref<129xf32, #tpu.memory_space<smem>>
    %132 = vector.broadcast %131 : f32 to vector<14x128xf32>
    %133 = arith.mulf %130, %132 : vector<14x128xf32>
    %134 = arith.addf %125, %133 : vector<14x128xf32>
    %c48 = arith.constant 48 : index
    %135 = memref.load %arg1[%c48] : memref<129xf32, #tpu.memory_space<smem>>
    %136 = vector.broadcast %135 : f32 to vector<14x128xf32>
    %137 = arith.mulf %130, %136 : vector<14x128xf32>
    %138 = arith.addf %129, %137 : vector<14x128xf32>
    %139 = vector.extract_strided_slice %35 {offsets = [2, 0], sizes = [14, 128], strides = [1, 1]} : vector<16x128xf32> to vector<14x128xf32>
    %c15 = arith.constant 15 : index
    %140 = memref.load %arg1[%c15] : memref<129xf32, #tpu.memory_space<smem>>
    %141 = vector.broadcast %140 : f32 to vector<14x128xf32>
    %142 = arith.mulf %139, %141 : vector<14x128xf32>
    %143 = arith.addf %134, %142 : vector<14x128xf32>
    %c51 = arith.constant 51 : index
    %144 = memref.load %arg1[%c51] : memref<129xf32, #tpu.memory_space<smem>>
    %145 = vector.broadcast %144 : f32 to vector<14x128xf32>
    %146 = arith.mulf %139, %145 : vector<14x128xf32>
    %147 = arith.addf %138, %146 : vector<14x128xf32>
    %c127_i32_16 = arith.constant 127 : i32
    %148 = tpu.dynamic_rotate %35 by %c127_i32_16 dim 1 : vector<16x128xf32>, i32 -> vector<16x128xf32>
    %149 = vector.extract_strided_slice %148 {offsets = [0, 0], sizes = [14, 128], strides = [1, 1]} : vector<16x128xf32> to vector<14x128xf32>
    %c10 = arith.constant 10 : index
    %150 = memref.load %arg1[%c10] : memref<129xf32, #tpu.memory_space<smem>>
    %151 = vector.broadcast %150 : f32 to vector<14x128xf32>
    %152 = arith.mulf %149, %151 : vector<14x128xf32>
    %153 = arith.addf %143, %152 : vector<14x128xf32>
    %c46 = arith.constant 46 : index
    %154 = memref.load %arg1[%c46] : memref<129xf32, #tpu.memory_space<smem>>
    %155 = vector.broadcast %154 : f32 to vector<14x128xf32>
    %156 = arith.mulf %149, %155 : vector<14x128xf32>
    %157 = arith.addf %147, %156 : vector<14x128xf32>
    %158 = vector.extract_strided_slice %148 {offsets = [1, 0], sizes = [14, 128], strides = [1, 1]} : vector<16x128xf32> to vector<14x128xf32>
    %c13 = arith.constant 13 : index
    %159 = memref.load %arg1[%c13] : memref<129xf32, #tpu.memory_space<smem>>
    %160 = vector.broadcast %159 : f32 to vector<14x128xf32>
    %161 = arith.mulf %158, %160 : vector<14x128xf32>
    %162 = arith.addf %153, %161 : vector<14x128xf32>
    %c49 = arith.constant 49 : index
    %163 = memref.load %arg1[%c49] : memref<129xf32, #tpu.memory_space<smem>>
    %164 = vector.broadcast %163 : f32 to vector<14x128xf32>
    %165 = arith.mulf %158, %164 : vector<14x128xf32>
    %166 = arith.addf %157, %165 : vector<14x128xf32>
    %167 = vector.extract_strided_slice %148 {offsets = [2, 0], sizes = [14, 128], strides = [1, 1]} : vector<16x128xf32> to vector<14x128xf32>
    %c16 = arith.constant 16 : index
    %168 = memref.load %arg1[%c16] : memref<129xf32, #tpu.memory_space<smem>>
    %169 = vector.broadcast %168 : f32 to vector<14x128xf32>
    %170 = arith.mulf %167, %169 : vector<14x128xf32>
    %171 = arith.addf %162, %170 : vector<14x128xf32>
    %c52 = arith.constant 52 : index
    %172 = memref.load %arg1[%c52] : memref<129xf32, #tpu.memory_space<smem>>
    %173 = vector.broadcast %172 : f32 to vector<14x128xf32>
    %174 = arith.mulf %167, %173 : vector<14x128xf32>
    %175 = arith.addf %166, %174 : vector<14x128xf32>
    %c126_i32_17 = arith.constant 126 : i32
    %176 = tpu.dynamic_rotate %35 by %c126_i32_17 dim 1 : vector<16x128xf32>, i32 -> vector<16x128xf32>
    %177 = vector.extract_strided_slice %176 {offsets = [0, 0], sizes = [14, 128], strides = [1, 1]} : vector<16x128xf32> to vector<14x128xf32>
    %c11 = arith.constant 11 : index
    %178 = memref.load %arg1[%c11] : memref<129xf32, #tpu.memory_space<smem>>
    %179 = vector.broadcast %178 : f32 to vector<14x128xf32>
    %180 = arith.mulf %177, %179 : vector<14x128xf32>
    %181 = arith.addf %171, %180 : vector<14x128xf32>
    %c47 = arith.constant 47 : index
    %182 = memref.load %arg1[%c47] : memref<129xf32, #tpu.memory_space<smem>>
    %183 = vector.broadcast %182 : f32 to vector<14x128xf32>
    %184 = arith.mulf %177, %183 : vector<14x128xf32>
    %185 = arith.addf %175, %184 : vector<14x128xf32>
    %186 = vector.extract_strided_slice %176 {offsets = [1, 0], sizes = [14, 128], strides = [1, 1]} : vector<16x128xf32> to vector<14x128xf32>
    %c14 = arith.constant 14 : index
    %187 = memref.load %arg1[%c14] : memref<129xf32, #tpu.memory_space<smem>>
    %188 = vector.broadcast %187 : f32 to vector<14x128xf32>
    %189 = arith.mulf %186, %188 : vector<14x128xf32>
    %190 = arith.addf %181, %189 : vector<14x128xf32>
    %c50 = arith.constant 50 : index
    %191 = memref.load %arg1[%c50] : memref<129xf32, #tpu.memory_space<smem>>
    %192 = vector.broadcast %191 : f32 to vector<14x128xf32>
    %193 = arith.mulf %186, %192 : vector<14x128xf32>
    %194 = arith.addf %185, %193 : vector<14x128xf32>
    %195 = vector.extract_strided_slice %176 {offsets = [2, 0], sizes = [14, 128], strides = [1, 1]} : vector<16x128xf32> to vector<14x128xf32>
    %c17 = arith.constant 17 : index
    %196 = memref.load %arg1[%c17] : memref<129xf32, #tpu.memory_space<smem>>
    %197 = vector.broadcast %196 : f32 to vector<14x128xf32>
    %198 = arith.mulf %195, %197 : vector<14x128xf32>
    %199 = arith.addf %190, %198 : vector<14x128xf32>
    %c53 = arith.constant 53 : index
    %200 = memref.load %arg1[%c53] : memref<129xf32, #tpu.memory_space<smem>>
    %201 = vector.broadcast %200 : f32 to vector<14x128xf32>
    %202 = arith.mulf %195, %201 : vector<14x128xf32>
    %203 = arith.addf %194, %202 : vector<14x128xf32>
    %204 = vector.extract_strided_slice %37 {offsets = [0, 0], sizes = [14, 128], strides = [1, 1]} : vector<16x128xf32> to vector<14x128xf32>
    %c18 = arith.constant 18 : index
    %205 = memref.load %arg1[%c18] : memref<129xf32, #tpu.memory_space<smem>>
    %206 = vector.broadcast %205 : f32 to vector<14x128xf32>
    %207 = arith.mulf %204, %206 : vector<14x128xf32>
    %208 = arith.addf %199, %207 : vector<14x128xf32>
    %c54 = arith.constant 54 : index
    %209 = memref.load %arg1[%c54] : memref<129xf32, #tpu.memory_space<smem>>
    %210 = vector.broadcast %209 : f32 to vector<14x128xf32>
    %211 = arith.mulf %204, %210 : vector<14x128xf32>
    %212 = arith.addf %203, %211 : vector<14x128xf32>
    %213 = vector.extract_strided_slice %37 {offsets = [1, 0], sizes = [14, 128], strides = [1, 1]} : vector<16x128xf32> to vector<14x128xf32>
    %c21 = arith.constant 21 : index
    %214 = memref.load %arg1[%c21] : memref<129xf32, #tpu.memory_space<smem>>
    %215 = vector.broadcast %214 : f32 to vector<14x128xf32>
    %216 = arith.mulf %213, %215 : vector<14x128xf32>
    %217 = arith.addf %208, %216 : vector<14x128xf32>
    %c57 = arith.constant 57 : index
    %218 = memref.load %arg1[%c57] : memref<129xf32, #tpu.memory_space<smem>>
    %219 = vector.broadcast %218 : f32 to vector<14x128xf32>
    %220 = arith.mulf %213, %219 : vector<14x128xf32>
    %221 = arith.addf %212, %220 : vector<14x128xf32>
    %222 = vector.extract_strided_slice %37 {offsets = [2, 0], sizes = [14, 128], strides = [1, 1]} : vector<16x128xf32> to vector<14x128xf32>
    %c24 = arith.constant 24 : index
    %223 = memref.load %arg1[%c24] : memref<129xf32, #tpu.memory_space<smem>>
    %224 = vector.broadcast %223 : f32 to vector<14x128xf32>
    %225 = arith.mulf %222, %224 : vector<14x128xf32>
    %226 = arith.addf %217, %225 : vector<14x128xf32>
    %c60 = arith.constant 60 : index
    %227 = memref.load %arg1[%c60] : memref<129xf32, #tpu.memory_space<smem>>
    %228 = vector.broadcast %227 : f32 to vector<14x128xf32>
    %229 = arith.mulf %222, %228 : vector<14x128xf32>
    %230 = arith.addf %221, %229 : vector<14x128xf32>
    %c127_i32_18 = arith.constant 127 : i32
    %231 = tpu.dynamic_rotate %37 by %c127_i32_18 dim 1 : vector<16x128xf32>, i32 -> vector<16x128xf32>
    %232 = vector.extract_strided_slice %231 {offsets = [0, 0], sizes = [14, 128], strides = [1, 1]} : vector<16x128xf32> to vector<14x128xf32>
    %c19 = arith.constant 19 : index
    %233 = memref.load %arg1[%c19] : memref<129xf32, #tpu.memory_space<smem>>
    %234 = vector.broadcast %233 : f32 to vector<14x128xf32>
    %235 = arith.mulf %232, %234 : vector<14x128xf32>
    %236 = arith.addf %226, %235 : vector<14x128xf32>
    %c55 = arith.constant 55 : index
    %237 = memref.load %arg1[%c55] : memref<129xf32, #tpu.memory_space<smem>>
    %238 = vector.broadcast %237 : f32 to vector<14x128xf32>
    %239 = arith.mulf %232, %238 : vector<14x128xf32>
    %240 = arith.addf %230, %239 : vector<14x128xf32>
    %241 = vector.extract_strided_slice %231 {offsets = [1, 0], sizes = [14, 128], strides = [1, 1]} : vector<16x128xf32> to vector<14x128xf32>
    %c22 = arith.constant 22 : index
    %242 = memref.load %arg1[%c22] : memref<129xf32, #tpu.memory_space<smem>>
    %243 = vector.broadcast %242 : f32 to vector<14x128xf32>
    %244 = arith.mulf %241, %243 : vector<14x128xf32>
    %245 = arith.addf %236, %244 : vector<14x128xf32>
    %c58 = arith.constant 58 : index
    %246 = memref.load %arg1[%c58] : memref<129xf32, #tpu.memory_space<smem>>
    %247 = vector.broadcast %246 : f32 to vector<14x128xf32>
    %248 = arith.mulf %241, %247 : vector<14x128xf32>
    %249 = arith.addf %240, %248 : vector<14x128xf32>
    %250 = vector.extract_strided_slice %231 {offsets = [2, 0], sizes = [14, 128], strides = [1, 1]} : vector<16x128xf32> to vector<14x128xf32>
    %c25 = arith.constant 25 : index
    %251 = memref.load %arg1[%c25] : memref<129xf32, #tpu.memory_space<smem>>
    %252 = vector.broadcast %251 : f32 to vector<14x128xf32>
    %253 = arith.mulf %250, %252 : vector<14x128xf32>
    %254 = arith.addf %245, %253 : vector<14x128xf32>
    %c61 = arith.constant 61 : index
    %255 = memref.load %arg1[%c61] : memref<129xf32, #tpu.memory_space<smem>>
    %256 = vector.broadcast %255 : f32 to vector<14x128xf32>
    %257 = arith.mulf %250, %256 : vector<14x128xf32>
    %258 = arith.addf %249, %257 : vector<14x128xf32>
    %c126_i32_19 = arith.constant 126 : i32
    %259 = tpu.dynamic_rotate %37 by %c126_i32_19 dim 1 : vector<16x128xf32>, i32 -> vector<16x128xf32>
    %260 = vector.extract_strided_slice %259 {offsets = [0, 0], sizes = [14, 128], strides = [1, 1]} : vector<16x128xf32> to vector<14x128xf32>
    %c20 = arith.constant 20 : index
    %261 = memref.load %arg1[%c20] : memref<129xf32, #tpu.memory_space<smem>>
    %262 = vector.broadcast %261 : f32 to vector<14x128xf32>
    %263 = arith.mulf %260, %262 : vector<14x128xf32>
    %264 = arith.addf %254, %263 : vector<14x128xf32>
    %c56 = arith.constant 56 : index
    %265 = memref.load %arg1[%c56] : memref<129xf32, #tpu.memory_space<smem>>
    %266 = vector.broadcast %265 : f32 to vector<14x128xf32>
    %267 = arith.mulf %260, %266 : vector<14x128xf32>
    %268 = arith.addf %258, %267 : vector<14x128xf32>
    %269 = vector.extract_strided_slice %259 {offsets = [1, 0], sizes = [14, 128], strides = [1, 1]} : vector<16x128xf32> to vector<14x128xf32>
    %c23 = arith.constant 23 : index
    %270 = memref.load %arg1[%c23] : memref<129xf32, #tpu.memory_space<smem>>
    %271 = vector.broadcast %270 : f32 to vector<14x128xf32>
    %272 = arith.mulf %269, %271 : vector<14x128xf32>
    %273 = arith.addf %264, %272 : vector<14x128xf32>
    %c59 = arith.constant 59 : index
    %274 = memref.load %arg1[%c59] : memref<129xf32, #tpu.memory_space<smem>>
    %275 = vector.broadcast %274 : f32 to vector<14x128xf32>
    %276 = arith.mulf %269, %275 : vector<14x128xf32>
    %277 = arith.addf %268, %276 : vector<14x128xf32>
    %278 = vector.extract_strided_slice %259 {offsets = [2, 0], sizes = [14, 128], strides = [1, 1]} : vector<16x128xf32> to vector<14x128xf32>
    %c26 = arith.constant 26 : index
    %279 = memref.load %arg1[%c26] : memref<129xf32, #tpu.memory_space<smem>>
    %280 = vector.broadcast %279 : f32 to vector<14x128xf32>
    %281 = arith.mulf %278, %280 : vector<14x128xf32>
    %282 = arith.addf %273, %281 : vector<14x128xf32>
    %c62 = arith.constant 62 : index
    %283 = memref.load %arg1[%c62] : memref<129xf32, #tpu.memory_space<smem>>
    %284 = vector.broadcast %283 : f32 to vector<14x128xf32>
    %285 = arith.mulf %278, %284 : vector<14x128xf32>
    %286 = arith.addf %277, %285 : vector<14x128xf32>
    %287 = vector.extract_strided_slice %39 {offsets = [0, 0], sizes = [14, 128], strides = [1, 1]} : vector<16x128xf32> to vector<14x128xf32>
    %c27 = arith.constant 27 : index
    %288 = memref.load %arg1[%c27] : memref<129xf32, #tpu.memory_space<smem>>
    %289 = vector.broadcast %288 : f32 to vector<14x128xf32>
    %290 = arith.mulf %287, %289 : vector<14x128xf32>
    %291 = arith.addf %282, %290 : vector<14x128xf32>
    %c63 = arith.constant 63 : index
    %292 = memref.load %arg1[%c63] : memref<129xf32, #tpu.memory_space<smem>>
    %293 = vector.broadcast %292 : f32 to vector<14x128xf32>
    %294 = arith.mulf %287, %293 : vector<14x128xf32>
    %295 = arith.addf %286, %294 : vector<14x128xf32>
    %296 = vector.extract_strided_slice %39 {offsets = [1, 0], sizes = [14, 128], strides = [1, 1]} : vector<16x128xf32> to vector<14x128xf32>
    %c30 = arith.constant 30 : index
    %297 = memref.load %arg1[%c30] : memref<129xf32, #tpu.memory_space<smem>>
    %298 = vector.broadcast %297 : f32 to vector<14x128xf32>
    %299 = arith.mulf %296, %298 : vector<14x128xf32>
    %300 = arith.addf %291, %299 : vector<14x128xf32>
    %c66 = arith.constant 66 : index
    %301 = memref.load %arg1[%c66] : memref<129xf32, #tpu.memory_space<smem>>
    %302 = vector.broadcast %301 : f32 to vector<14x128xf32>
    %303 = arith.mulf %296, %302 : vector<14x128xf32>
    %304 = arith.addf %295, %303 : vector<14x128xf32>
    %305 = vector.extract_strided_slice %39 {offsets = [2, 0], sizes = [14, 128], strides = [1, 1]} : vector<16x128xf32> to vector<14x128xf32>
    %c33 = arith.constant 33 : index
    %306 = memref.load %arg1[%c33] : memref<129xf32, #tpu.memory_space<smem>>
    %307 = vector.broadcast %306 : f32 to vector<14x128xf32>
    %308 = arith.mulf %305, %307 : vector<14x128xf32>
    %309 = arith.addf %300, %308 : vector<14x128xf32>
    %c69 = arith.constant 69 : index
    %310 = memref.load %arg1[%c69] : memref<129xf32, #tpu.memory_space<smem>>
    %311 = vector.broadcast %310 : f32 to vector<14x128xf32>
    %312 = arith.mulf %305, %311 : vector<14x128xf32>
    %313 = arith.addf %304, %312 : vector<14x128xf32>
    %c127_i32_20 = arith.constant 127 : i32
    %314 = tpu.dynamic_rotate %39 by %c127_i32_20 dim 1 : vector<16x128xf32>, i32 -> vector<16x128xf32>
    %315 = vector.extract_strided_slice %314 {offsets = [0, 0], sizes = [14, 128], strides = [1, 1]} : vector<16x128xf32> to vector<14x128xf32>
    %c28 = arith.constant 28 : index
    %316 = memref.load %arg1[%c28] : memref<129xf32, #tpu.memory_space<smem>>
    %317 = vector.broadcast %316 : f32 to vector<14x128xf32>
    %318 = arith.mulf %315, %317 : vector<14x128xf32>
    %319 = arith.addf %309, %318 : vector<14x128xf32>
    %c64 = arith.constant 64 : index
    %320 = memref.load %arg1[%c64] : memref<129xf32, #tpu.memory_space<smem>>
    %321 = vector.broadcast %320 : f32 to vector<14x128xf32>
    %322 = arith.mulf %315, %321 : vector<14x128xf32>
    %323 = arith.addf %313, %322 : vector<14x128xf32>
    %324 = vector.extract_strided_slice %314 {offsets = [1, 0], sizes = [14, 128], strides = [1, 1]} : vector<16x128xf32> to vector<14x128xf32>
    %c31 = arith.constant 31 : index
    %325 = memref.load %arg1[%c31] : memref<129xf32, #tpu.memory_space<smem>>
    %326 = vector.broadcast %325 : f32 to vector<14x128xf32>
    %327 = arith.mulf %324, %326 : vector<14x128xf32>
    %328 = arith.addf %319, %327 : vector<14x128xf32>
    %c67 = arith.constant 67 : index
    %329 = memref.load %arg1[%c67] : memref<129xf32, #tpu.memory_space<smem>>
    %330 = vector.broadcast %329 : f32 to vector<14x128xf32>
    %331 = arith.mulf %324, %330 : vector<14x128xf32>
    %332 = arith.addf %323, %331 : vector<14x128xf32>
    %333 = vector.extract_strided_slice %314 {offsets = [2, 0], sizes = [14, 128], strides = [1, 1]} : vector<16x128xf32> to vector<14x128xf32>
    %c34 = arith.constant 34 : index
    %334 = memref.load %arg1[%c34] : memref<129xf32, #tpu.memory_space<smem>>
    %335 = vector.broadcast %334 : f32 to vector<14x128xf32>
    %336 = arith.mulf %333, %335 : vector<14x128xf32>
    %337 = arith.addf %328, %336 : vector<14x128xf32>
    %c70 = arith.constant 70 : index
    %338 = memref.load %arg1[%c70] : memref<129xf32, #tpu.memory_space<smem>>
    %339 = vector.broadcast %338 : f32 to vector<14x128xf32>
    %340 = arith.mulf %333, %339 : vector<14x128xf32>
    %341 = arith.addf %332, %340 : vector<14x128xf32>
    %c126_i32_21 = arith.constant 126 : i32
    %342 = tpu.dynamic_rotate %39 by %c126_i32_21 dim 1 : vector<16x128xf32>, i32 -> vector<16x128xf32>
    %343 = vector.extract_strided_slice %342 {offsets = [0, 0], sizes = [14, 128], strides = [1, 1]} : vector<16x128xf32> to vector<14x128xf32>
    %c29 = arith.constant 29 : index
    %344 = memref.load %arg1[%c29] : memref<129xf32, #tpu.memory_space<smem>>
    %345 = vector.broadcast %344 : f32 to vector<14x128xf32>
    %346 = arith.mulf %343, %345 : vector<14x128xf32>
    %347 = arith.addf %337, %346 : vector<14x128xf32>
    %c65 = arith.constant 65 : index
    %348 = memref.load %arg1[%c65] : memref<129xf32, #tpu.memory_space<smem>>
    %349 = vector.broadcast %348 : f32 to vector<14x128xf32>
    %350 = arith.mulf %343, %349 : vector<14x128xf32>
    %351 = arith.addf %341, %350 : vector<14x128xf32>
    %352 = vector.extract_strided_slice %342 {offsets = [1, 0], sizes = [14, 128], strides = [1, 1]} : vector<16x128xf32> to vector<14x128xf32>
    %c32 = arith.constant 32 : index
    %353 = memref.load %arg1[%c32] : memref<129xf32, #tpu.memory_space<smem>>
    %354 = vector.broadcast %353 : f32 to vector<14x128xf32>
    %355 = arith.mulf %352, %354 : vector<14x128xf32>
    %356 = arith.addf %347, %355 : vector<14x128xf32>
    %c68 = arith.constant 68 : index
    %357 = memref.load %arg1[%c68] : memref<129xf32, #tpu.memory_space<smem>>
    %358 = vector.broadcast %357 : f32 to vector<14x128xf32>
    %359 = arith.mulf %352, %358 : vector<14x128xf32>
    %360 = arith.addf %351, %359 : vector<14x128xf32>
    %361 = vector.extract_strided_slice %342 {offsets = [2, 0], sizes = [14, 128], strides = [1, 1]} : vector<16x128xf32> to vector<14x128xf32>
    %c35 = arith.constant 35 : index
    %362 = memref.load %arg1[%c35] : memref<129xf32, #tpu.memory_space<smem>>
    %363 = vector.broadcast %362 : f32 to vector<14x128xf32>
    %364 = arith.mulf %361, %363 : vector<14x128xf32>
    %365 = arith.addf %356, %364 : vector<14x128xf32>
    %c71 = arith.constant 71 : index
    %366 = memref.load %arg1[%c71] : memref<129xf32, #tpu.memory_space<smem>>
    %367 = vector.broadcast %366 : f32 to vector<14x128xf32>
    %368 = arith.mulf %361, %367 : vector<14x128xf32>
    %369 = arith.addf %360, %368 : vector<14x128xf32>
    %c72 = arith.constant 72 : index
    %370 = memref.load %arg1[%c72] : memref<129xf32, #tpu.memory_space<smem>>
    %371 = vector.broadcast %370 : f32 to vector<14x128xf32>
    %372 = arith.addf %365, %371 : vector<14x128xf32>
    %c73 = arith.constant 73 : index
    %373 = memref.load %arg1[%c73] : memref<129xf32, #tpu.memory_space<smem>>
    %374 = vector.broadcast %373 : f32 to vector<14x128xf32>
    %375 = arith.addf %369, %374 : vector<14x128xf32>
    %c74 = arith.constant 74 : index
    %376 = memref.load %arg1[%c74] : memref<129xf32, #tpu.memory_space<smem>>
    %c76 = arith.constant 76 : index
    %377 = memref.load %arg1[%c76] : memref<129xf32, #tpu.memory_space<smem>>
    %cst = arith.constant 0.000000e+00 : f32
    %378 = vector.broadcast %cst : f32 to vector<14x128xf32>
    %379 = arith.select %23, %372, %378 : vector<14x128xi1>, vector<14x128xf32>
    %cst_22 = arith.constant dense<0.000000e+00> : vector<14xf32>
    %380 = vector.multi_reduction <add>, %379, %cst_22 [1] : vector<14x128xf32> to vector<14xf32>
    %381 = vector.shape_cast %380 : vector<14xf32> to vector<14x1xf32>
    %cst_23 = arith.constant dense<0.000000e+00> : vector<1xf32>
    %382 = vector.multi_reduction <add>, %381, %cst_23 [0] : vector<14x1xf32> to vector<1xf32>
    %383 = vector.shape_cast %382 : vector<1xf32> to vector<1x1xf32>
    %384 = arith.mulf %379, %379 : vector<14x128xf32>
    %cst_24 = arith.constant dense<0.000000e+00> : vector<14xf32>
    %385 = vector.multi_reduction <add>, %384, %cst_24 [1] : vector<14x128xf32> to vector<14xf32>
    %386 = vector.shape_cast %385 : vector<14xf32> to vector<14x1xf32>
    %cst_25 = arith.constant dense<0.000000e+00> : vector<1xf32>
    %387 = vector.multi_reduction <add>, %386, %cst_25 [0] : vector<14x1xf32> to vector<1xf32>
    %388 = vector.shape_cast %387 : vector<1xf32> to vector<1x1xf32>
    %cst_26 = arith.constant 0.00255102036 : f32
    %389 = vector.broadcast %cst_26 : f32 to vector<1x1xf32>
    %390 = arith.mulf %383, %389 : vector<1x1xf32>
    %cst_27 = arith.constant 0.00255102036 : f32
    %391 = vector.broadcast %cst_27 : f32 to vector<1x1xf32>
    %392 = arith.mulf %388, %391 : vector<1x1xf32>
    %393 = arith.mulf %390, %390 : vector<1x1xf32>
    %394 = arith.subf %392, %393 : vector<1x1xf32>
    %cst_28 = arith.constant 9.99999974E-6 : f32
    %395 = vector.broadcast %cst_28 : f32 to vector<1x1xf32>
    %396 = arith.addf %394, %395 : vector<1x1xf32>
    %397 = math.rsqrt %396 : vector<1x1xf32>
    %398 = vector.broadcast %376 : f32 to vector<1x1xf32>
    %399 = arith.mulf %398, %397 : vector<1x1xf32>
    %400 = arith.mulf %390, %399 : vector<1x1xf32>
    %401 = vector.broadcast %377 : f32 to vector<1x1xf32>
    %402 = arith.subf %401, %400 : vector<1x1xf32>
    %403 = vector.broadcast %399 : vector<1x1xf32> to vector<14x128xf32>
    %404 = arith.mulf %372, %403 : vector<14x128xf32>
    %405 = vector.broadcast %402 : vector<1x1xf32> to vector<14x128xf32>
    %406 = arith.addf %404, %405 : vector<14x128xf32>
    %cst_29 = arith.constant 0.000000e+00 : f32
    %407 = vector.broadcast %cst_29 : f32 to vector<14x128xf32>
    %408 = arith.maximumf %406, %407 : vector<14x128xf32>
    %409 = vector.extract_strided_slice %408 {offsets = [0, 0], sizes = [1, 128], strides = [1, 1]} : vector<14x128xf32> to vector<1x128xf32>
    %410 = vector.extract_strided_slice %408 {offsets = [13, 0], sizes = [1, 128], strides = [1, 1]} : vector<14x128xf32> to vector<1x128xf32>
    %411 = tpu.concatenate %409, %408, %410 in 0 : vector<1x128xf32>, vector<14x128xf32>, vector<1x128xf32> -> vector<16x128xf32>
    %c1_i32_30 = arith.constant 1 : i32
    %412 = tpu.dynamic_rotate %411 by %c1_i32_30 dim 1 : vector<16x128xf32>, i32 -> vector<16x128xf32>
    %c2_i32 = arith.constant 2 : i32
    %413 = tpu.dynamic_rotate %411 by %c2_i32 dim 1 : vector<16x128xf32>, i32 -> vector<16x128xf32>
    %414 = arith.select %31, %413, %412 : vector<16x128xi1>, vector<16x128xf32>
    %415 = arith.select %27, %411, %414 : vector<16x128xi1>, vector<16x128xf32>
    %c75 = arith.constant 75 : index
    %416 = memref.load %arg1[%c75] : memref<129xf32, #tpu.memory_space<smem>>
    %c77 = arith.constant 77 : index
    %417 = memref.load %arg1[%c77] : memref<129xf32, #tpu.memory_space<smem>>
    %cst_31 = arith.constant 0.000000e+00 : f32
    %418 = vector.broadcast %cst_31 : f32 to vector<14x128xf32>
    %419 = arith.select %23, %375, %418 : vector<14x128xi1>, vector<14x128xf32>
    %cst_32 = arith.constant dense<0.000000e+00> : vector<14xf32>
    %420 = vector.multi_reduction <add>, %419, %cst_32 [1] : vector<14x128xf32> to vector<14xf32>
    %421 = vector.shape_cast %420 : vector<14xf32> to vector<14x1xf32>
    %cst_33 = arith.constant dense<0.000000e+00> : vector<1xf32>
    %422 = vector.multi_reduction <add>, %421, %cst_33 [0] : vector<14x1xf32> to vector<1xf32>
    %423 = vector.shape_cast %422 : vector<1xf32> to vector<1x1xf32>
    %424 = arith.mulf %419, %419 : vector<14x128xf32>
    %cst_34 = arith.constant dense<0.000000e+00> : vector<14xf32>
    %425 = vector.multi_reduction <add>, %424, %cst_34 [1] : vector<14x128xf32> to vector<14xf32>
    %426 = vector.shape_cast %425 : vector<14xf32> to vector<14x1xf32>
    %cst_35 = arith.constant dense<0.000000e+00> : vector<1xf32>
    %427 = vector.multi_reduction <add>, %426, %cst_35 [0] : vector<14x1xf32> to vector<1xf32>
    %428 = vector.shape_cast %427 : vector<1xf32> to vector<1x1xf32>
    %cst_36 = arith.constant 0.00255102036 : f32
    %429 = vector.broadcast %cst_36 : f32 to vector<1x1xf32>
    %430 = arith.mulf %423, %429 : vector<1x1xf32>
    %cst_37 = arith.constant 0.00255102036 : f32
    %431 = vector.broadcast %cst_37 : f32 to vector<1x1xf32>
    %432 = arith.mulf %428, %431 : vector<1x1xf32>
    %433 = arith.mulf %430, %430 : vector<1x1xf32>
    %434 = arith.subf %432, %433 : vector<1x1xf32>
    %cst_38 = arith.constant 9.99999974E-6 : f32
    %435 = vector.broadcast %cst_38 : f32 to vector<1x1xf32>
    %436 = arith.addf %434, %435 : vector<1x1xf32>
    %437 = math.rsqrt %436 : vector<1x1xf32>
    %438 = vector.broadcast %416 : f32 to vector<1x1xf32>
    %439 = arith.mulf %438, %437 : vector<1x1xf32>
    %440 = arith.mulf %430, %439 : vector<1x1xf32>
    %441 = vector.broadcast %417 : f32 to vector<1x1xf32>
    %442 = arith.subf %441, %440 : vector<1x1xf32>
    %443 = vector.broadcast %439 : vector<1x1xf32> to vector<14x128xf32>
    %444 = arith.mulf %375, %443 : vector<14x128xf32>
    %445 = vector.broadcast %442 : vector<1x1xf32> to vector<14x128xf32>
    %446 = arith.addf %444, %445 : vector<14x128xf32>
    %cst_39 = arith.constant 0.000000e+00 : f32
    %447 = vector.broadcast %cst_39 : f32 to vector<14x128xf32>
    %448 = arith.maximumf %446, %447 : vector<14x128xf32>
    %449 = vector.extract_strided_slice %448 {offsets = [0, 0], sizes = [1, 128], strides = [1, 1]} : vector<14x128xf32> to vector<1x128xf32>
    %450 = vector.extract_strided_slice %448 {offsets = [13, 0], sizes = [1, 128], strides = [1, 1]} : vector<14x128xf32> to vector<1x128xf32>
    %451 = tpu.concatenate %449, %448, %450 in 0 : vector<1x128xf32>, vector<14x128xf32>, vector<1x128xf32> -> vector<16x128xf32>
    %c1_i32_40 = arith.constant 1 : i32
    %452 = tpu.dynamic_rotate %451 by %c1_i32_40 dim 1 : vector<16x128xf32>, i32 -> vector<16x128xf32>
    %c2_i32_41 = arith.constant 2 : i32
    %453 = tpu.dynamic_rotate %451 by %c2_i32_41 dim 1 : vector<16x128xf32>, i32 -> vector<16x128xf32>
    %454 = arith.select %31, %453, %452 : vector<16x128xi1>, vector<16x128xf32>
    %455 = arith.select %27, %451, %454 : vector<16x128xi1>, vector<16x128xf32>
    %456 = vector.extract_strided_slice %415 {offsets = [0, 0], sizes = [14, 128], strides = [1, 1]} : vector<16x128xf32> to vector<14x128xf32>
    %c78 = arith.constant 78 : index
    %457 = memref.load %arg1[%c78] : memref<129xf32, #tpu.memory_space<smem>>
    %458 = vector.broadcast %457 : f32 to vector<14x128xf32>
    %459 = arith.mulf %456, %458 : vector<14x128xf32>
    %c96 = arith.constant 96 : index
    %460 = memref.load %arg1[%c96] : memref<129xf32, #tpu.memory_space<smem>>
    %461 = vector.broadcast %460 : f32 to vector<14x128xf32>
    %462 = arith.mulf %456, %461 : vector<14x128xf32>
    %463 = vector.extract_strided_slice %415 {offsets = [1, 0], sizes = [14, 128], strides = [1, 1]} : vector<16x128xf32> to vector<14x128xf32>
    %c81 = arith.constant 81 : index
    %464 = memref.load %arg1[%c81] : memref<129xf32, #tpu.memory_space<smem>>
    %465 = vector.broadcast %464 : f32 to vector<14x128xf32>
    %466 = arith.mulf %463, %465 : vector<14x128xf32>
    %467 = arith.addf %459, %466 : vector<14x128xf32>
    %c99 = arith.constant 99 : index
    %468 = memref.load %arg1[%c99] : memref<129xf32, #tpu.memory_space<smem>>
    %469 = vector.broadcast %468 : f32 to vector<14x128xf32>
    %470 = arith.mulf %463, %469 : vector<14x128xf32>
    %471 = arith.addf %462, %470 : vector<14x128xf32>
    %472 = vector.extract_strided_slice %415 {offsets = [2, 0], sizes = [14, 128], strides = [1, 1]} : vector<16x128xf32> to vector<14x128xf32>
    %c84 = arith.constant 84 : index
    %473 = memref.load %arg1[%c84] : memref<129xf32, #tpu.memory_space<smem>>
    %474 = vector.broadcast %473 : f32 to vector<14x128xf32>
    %475 = arith.mulf %472, %474 : vector<14x128xf32>
    %476 = arith.addf %467, %475 : vector<14x128xf32>
    %c102 = arith.constant 102 : index
    %477 = memref.load %arg1[%c102] : memref<129xf32, #tpu.memory_space<smem>>
    %478 = vector.broadcast %477 : f32 to vector<14x128xf32>
    %479 = arith.mulf %472, %478 : vector<14x128xf32>
    %480 = arith.addf %471, %479 : vector<14x128xf32>
    %c127_i32_42 = arith.constant 127 : i32
    %481 = tpu.dynamic_rotate %415 by %c127_i32_42 dim 1 : vector<16x128xf32>, i32 -> vector<16x128xf32>
    %482 = vector.extract_strided_slice %481 {offsets = [0, 0], sizes = [14, 128], strides = [1, 1]} : vector<16x128xf32> to vector<14x128xf32>
    %c79 = arith.constant 79 : index
    %483 = memref.load %arg1[%c79] : memref<129xf32, #tpu.memory_space<smem>>
    %484 = vector.broadcast %483 : f32 to vector<14x128xf32>
    %485 = arith.mulf %482, %484 : vector<14x128xf32>
    %486 = arith.addf %476, %485 : vector<14x128xf32>
    %c97 = arith.constant 97 : index
    %487 = memref.load %arg1[%c97] : memref<129xf32, #tpu.memory_space<smem>>
    %488 = vector.broadcast %487 : f32 to vector<14x128xf32>
    %489 = arith.mulf %482, %488 : vector<14x128xf32>
    %490 = arith.addf %480, %489 : vector<14x128xf32>
    %491 = vector.extract_strided_slice %481 {offsets = [1, 0], sizes = [14, 128], strides = [1, 1]} : vector<16x128xf32> to vector<14x128xf32>
    %c82 = arith.constant 82 : index
    %492 = memref.load %arg1[%c82] : memref<129xf32, #tpu.memory_space<smem>>
    %493 = vector.broadcast %492 : f32 to vector<14x128xf32>
    %494 = arith.mulf %491, %493 : vector<14x128xf32>
    %495 = arith.addf %486, %494 : vector<14x128xf32>
    %c100 = arith.constant 100 : index
    %496 = memref.load %arg1[%c100] : memref<129xf32, #tpu.memory_space<smem>>
    %497 = vector.broadcast %496 : f32 to vector<14x128xf32>
    %498 = arith.mulf %491, %497 : vector<14x128xf32>
    %499 = arith.addf %490, %498 : vector<14x128xf32>
    %500 = vector.extract_strided_slice %481 {offsets = [2, 0], sizes = [14, 128], strides = [1, 1]} : vector<16x128xf32> to vector<14x128xf32>
    %c85 = arith.constant 85 : index
    %501 = memref.load %arg1[%c85] : memref<129xf32, #tpu.memory_space<smem>>
    %502 = vector.broadcast %501 : f32 to vector<14x128xf32>
    %503 = arith.mulf %500, %502 : vector<14x128xf32>
    %504 = arith.addf %495, %503 : vector<14x128xf32>
    %c103 = arith.constant 103 : index
    %505 = memref.load %arg1[%c103] : memref<129xf32, #tpu.memory_space<smem>>
    %506 = vector.broadcast %505 : f32 to vector<14x128xf32>
    %507 = arith.mulf %500, %506 : vector<14x128xf32>
    %508 = arith.addf %499, %507 : vector<14x128xf32>
    %c126_i32_43 = arith.constant 126 : i32
    %509 = tpu.dynamic_rotate %415 by %c126_i32_43 dim 1 : vector<16x128xf32>, i32 -> vector<16x128xf32>
    %510 = vector.extract_strided_slice %509 {offsets = [0, 0], sizes = [14, 128], strides = [1, 1]} : vector<16x128xf32> to vector<14x128xf32>
    %c80 = arith.constant 80 : index
    %511 = memref.load %arg1[%c80] : memref<129xf32, #tpu.memory_space<smem>>
    %512 = vector.broadcast %511 : f32 to vector<14x128xf32>
    %513 = arith.mulf %510, %512 : vector<14x128xf32>
    %514 = arith.addf %504, %513 : vector<14x128xf32>
    %c98 = arith.constant 98 : index
    %515 = memref.load %arg1[%c98] : memref<129xf32, #tpu.memory_space<smem>>
    %516 = vector.broadcast %515 : f32 to vector<14x128xf32>
    %517 = arith.mulf %510, %516 : vector<14x128xf32>
    %518 = arith.addf %508, %517 : vector<14x128xf32>
    %519 = vector.extract_strided_slice %509 {offsets = [1, 0], sizes = [14, 128], strides = [1, 1]} : vector<16x128xf32> to vector<14x128xf32>
    %c83 = arith.constant 83 : index
    %520 = memref.load %arg1[%c83] : memref<129xf32, #tpu.memory_space<smem>>
    %521 = vector.broadcast %520 : f32 to vector<14x128xf32>
    %522 = arith.mulf %519, %521 : vector<14x128xf32>
    %523 = arith.addf %514, %522 : vector<14x128xf32>
    %c101 = arith.constant 101 : index
    %524 = memref.load %arg1[%c101] : memref<129xf32, #tpu.memory_space<smem>>
    %525 = vector.broadcast %524 : f32 to vector<14x128xf32>
    %526 = arith.mulf %519, %525 : vector<14x128xf32>
    %527 = arith.addf %518, %526 : vector<14x128xf32>
    %528 = vector.extract_strided_slice %509 {offsets = [2, 0], sizes = [14, 128], strides = [1, 1]} : vector<16x128xf32> to vector<14x128xf32>
    %c86 = arith.constant 86 : index
    %529 = memref.load %arg1[%c86] : memref<129xf32, #tpu.memory_space<smem>>
    %530 = vector.broadcast %529 : f32 to vector<14x128xf32>
    %531 = arith.mulf %528, %530 : vector<14x128xf32>
    %532 = arith.addf %523, %531 : vector<14x128xf32>
    %c104 = arith.constant 104 : index
    %533 = memref.load %arg1[%c104] : memref<129xf32, #tpu.memory_space<smem>>
    %534 = vector.broadcast %533 : f32 to vector<14x128xf32>
    %535 = arith.mulf %528, %534 : vector<14x128xf32>
    %536 = arith.addf %527, %535 : vector<14x128xf32>
    %537 = vector.extract_strided_slice %455 {offsets = [0, 0], sizes = [14, 128], strides = [1, 1]} : vector<16x128xf32> to vector<14x128xf32>
    %c87 = arith.constant 87 : index
    %538 = memref.load %arg1[%c87] : memref<129xf32, #tpu.memory_space<smem>>
    %539 = vector.broadcast %538 : f32 to vector<14x128xf32>
    %540 = arith.mulf %537, %539 : vector<14x128xf32>
    %541 = arith.addf %532, %540 : vector<14x128xf32>
    %c105 = arith.constant 105 : index
    %542 = memref.load %arg1[%c105] : memref<129xf32, #tpu.memory_space<smem>>
    %543 = vector.broadcast %542 : f32 to vector<14x128xf32>
    %544 = arith.mulf %537, %543 : vector<14x128xf32>
    %545 = arith.addf %536, %544 : vector<14x128xf32>
    %546 = vector.extract_strided_slice %455 {offsets = [1, 0], sizes = [14, 128], strides = [1, 1]} : vector<16x128xf32> to vector<14x128xf32>
    %c90 = arith.constant 90 : index
    %547 = memref.load %arg1[%c90] : memref<129xf32, #tpu.memory_space<smem>>
    %548 = vector.broadcast %547 : f32 to vector<14x128xf32>
    %549 = arith.mulf %546, %548 : vector<14x128xf32>
    %550 = arith.addf %541, %549 : vector<14x128xf32>
    %c108 = arith.constant 108 : index
    %551 = memref.load %arg1[%c108] : memref<129xf32, #tpu.memory_space<smem>>
    %552 = vector.broadcast %551 : f32 to vector<14x128xf32>
    %553 = arith.mulf %546, %552 : vector<14x128xf32>
    %554 = arith.addf %545, %553 : vector<14x128xf32>
    %555 = vector.extract_strided_slice %455 {offsets = [2, 0], sizes = [14, 128], strides = [1, 1]} : vector<16x128xf32> to vector<14x128xf32>
    %c93 = arith.constant 93 : index
    %556 = memref.load %arg1[%c93] : memref<129xf32, #tpu.memory_space<smem>>
    %557 = vector.broadcast %556 : f32 to vector<14x128xf32>
    %558 = arith.mulf %555, %557 : vector<14x128xf32>
    %559 = arith.addf %550, %558 : vector<14x128xf32>
    %c111 = arith.constant 111 : index
    %560 = memref.load %arg1[%c111] : memref<129xf32, #tpu.memory_space<smem>>
    %561 = vector.broadcast %560 : f32 to vector<14x128xf32>
    %562 = arith.mulf %555, %561 : vector<14x128xf32>
    %563 = arith.addf %554, %562 : vector<14x128xf32>
    %c127_i32_44 = arith.constant 127 : i32
    %564 = tpu.dynamic_rotate %455 by %c127_i32_44 dim 1 : vector<16x128xf32>, i32 -> vector<16x128xf32>
    %565 = vector.extract_strided_slice %564 {offsets = [0, 0], sizes = [14, 128], strides = [1, 1]} : vector<16x128xf32> to vector<14x128xf32>
    %c88 = arith.constant 88 : index
    %566 = memref.load %arg1[%c88] : memref<129xf32, #tpu.memory_space<smem>>
    %567 = vector.broadcast %566 : f32 to vector<14x128xf32>
    %568 = arith.mulf %565, %567 : vector<14x128xf32>
    %569 = arith.addf %559, %568 : vector<14x128xf32>
    %c106 = arith.constant 106 : index
    %570 = memref.load %arg1[%c106] : memref<129xf32, #tpu.memory_space<smem>>
    %571 = vector.broadcast %570 : f32 to vector<14x128xf32>
    %572 = arith.mulf %565, %571 : vector<14x128xf32>
    %573 = arith.addf %563, %572 : vector<14x128xf32>
    %574 = vector.extract_strided_slice %564 {offsets = [1, 0], sizes = [14, 128], strides = [1, 1]} : vector<16x128xf32> to vector<14x128xf32>
    %c91 = arith.constant 91 : index
    %575 = memref.load %arg1[%c91] : memref<129xf32, #tpu.memory_space<smem>>
    %576 = vector.broadcast %575 : f32 to vector<14x128xf32>
    %577 = arith.mulf %574, %576 : vector<14x128xf32>
    %578 = arith.addf %569, %577 : vector<14x128xf32>
    %c109 = arith.constant 109 : index
    %579 = memref.load %arg1[%c109] : memref<129xf32, #tpu.memory_space<smem>>
    %580 = vector.broadcast %579 : f32 to vector<14x128xf32>
    %581 = arith.mulf %574, %580 : vector<14x128xf32>
    %582 = arith.addf %573, %581 : vector<14x128xf32>
    %583 = vector.extract_strided_slice %564 {offsets = [2, 0], sizes = [14, 128], strides = [1, 1]} : vector<16x128xf32> to vector<14x128xf32>
    %c94 = arith.constant 94 : index
    %584 = memref.load %arg1[%c94] : memref<129xf32, #tpu.memory_space<smem>>
    %585 = vector.broadcast %584 : f32 to vector<14x128xf32>
    %586 = arith.mulf %583, %585 : vector<14x128xf32>
    %587 = arith.addf %578, %586 : vector<14x128xf32>
    %c112 = arith.constant 112 : index
    %588 = memref.load %arg1[%c112] : memref<129xf32, #tpu.memory_space<smem>>
    %589 = vector.broadcast %588 : f32 to vector<14x128xf32>
    %590 = arith.mulf %583, %589 : vector<14x128xf32>
    %591 = arith.addf %582, %590 : vector<14x128xf32>
    %c126_i32_45 = arith.constant 126 : i32
    %592 = tpu.dynamic_rotate %455 by %c126_i32_45 dim 1 : vector<16x128xf32>, i32 -> vector<16x128xf32>
    %593 = vector.extract_strided_slice %592 {offsets = [0, 0], sizes = [14, 128], strides = [1, 1]} : vector<16x128xf32> to vector<14x128xf32>
    %c89 = arith.constant 89 : index
    %594 = memref.load %arg1[%c89] : memref<129xf32, #tpu.memory_space<smem>>
    %595 = vector.broadcast %594 : f32 to vector<14x128xf32>
    %596 = arith.mulf %593, %595 : vector<14x128xf32>
    %597 = arith.addf %587, %596 : vector<14x128xf32>
    %c107 = arith.constant 107 : index
    %598 = memref.load %arg1[%c107] : memref<129xf32, #tpu.memory_space<smem>>
    %599 = vector.broadcast %598 : f32 to vector<14x128xf32>
    %600 = arith.mulf %593, %599 : vector<14x128xf32>
    %601 = arith.addf %591, %600 : vector<14x128xf32>
    %602 = vector.extract_strided_slice %592 {offsets = [1, 0], sizes = [14, 128], strides = [1, 1]} : vector<16x128xf32> to vector<14x128xf32>
    %c92 = arith.constant 92 : index
    %603 = memref.load %arg1[%c92] : memref<129xf32, #tpu.memory_space<smem>>
    %604 = vector.broadcast %603 : f32 to vector<14x128xf32>
    %605 = arith.mulf %602, %604 : vector<14x128xf32>
    %606 = arith.addf %597, %605 : vector<14x128xf32>
    %c110 = arith.constant 110 : index
    %607 = memref.load %arg1[%c110] : memref<129xf32, #tpu.memory_space<smem>>
    %608 = vector.broadcast %607 : f32 to vector<14x128xf32>
    %609 = arith.mulf %602, %608 : vector<14x128xf32>
    %610 = arith.addf %601, %609 : vector<14x128xf32>
    %611 = vector.extract_strided_slice %592 {offsets = [2, 0], sizes = [14, 128], strides = [1, 1]} : vector<16x128xf32> to vector<14x128xf32>
    %c95 = arith.constant 95 : index
    %612 = memref.load %arg1[%c95] : memref<129xf32, #tpu.memory_space<smem>>
    %613 = vector.broadcast %612 : f32 to vector<14x128xf32>
    %614 = arith.mulf %611, %613 : vector<14x128xf32>
    %615 = arith.addf %606, %614 : vector<14x128xf32>
    %c113 = arith.constant 113 : index
    %616 = memref.load %arg1[%c113] : memref<129xf32, #tpu.memory_space<smem>>
    %617 = vector.broadcast %616 : f32 to vector<14x128xf32>
    %618 = arith.mulf %611, %617 : vector<14x128xf32>
    %619 = arith.addf %610, %618 : vector<14x128xf32>
    %c114 = arith.constant 114 : index
    %620 = memref.load %arg1[%c114] : memref<129xf32, #tpu.memory_space<smem>>
    %621 = vector.broadcast %620 : f32 to vector<14x128xf32>
    %622 = arith.addf %615, %621 : vector<14x128xf32>
    %c115 = arith.constant 115 : index
    %623 = memref.load %arg1[%c115] : memref<129xf32, #tpu.memory_space<smem>>
    %624 = vector.broadcast %623 : f32 to vector<14x128xf32>
    %625 = arith.addf %619, %624 : vector<14x128xf32>
    %c116 = arith.constant 116 : index
    %626 = memref.load %arg1[%c116] : memref<129xf32, #tpu.memory_space<smem>>
    %c118 = arith.constant 118 : index
    %627 = memref.load %arg1[%c118] : memref<129xf32, #tpu.memory_space<smem>>
    %cst_46 = arith.constant 0.000000e+00 : f32
    %628 = vector.broadcast %cst_46 : f32 to vector<14x128xf32>
    %629 = arith.select %23, %622, %628 : vector<14x128xi1>, vector<14x128xf32>
    %cst_47 = arith.constant dense<0.000000e+00> : vector<14xf32>
    %630 = vector.multi_reduction <add>, %629, %cst_47 [1] : vector<14x128xf32> to vector<14xf32>
    %631 = vector.shape_cast %630 : vector<14xf32> to vector<14x1xf32>
    %cst_48 = arith.constant dense<0.000000e+00> : vector<1xf32>
    %632 = vector.multi_reduction <add>, %631, %cst_48 [0] : vector<14x1xf32> to vector<1xf32>
    %633 = vector.shape_cast %632 : vector<1xf32> to vector<1x1xf32>
    %634 = arith.mulf %629, %629 : vector<14x128xf32>
    %cst_49 = arith.constant dense<0.000000e+00> : vector<14xf32>
    %635 = vector.multi_reduction <add>, %634, %cst_49 [1] : vector<14x128xf32> to vector<14xf32>
    %636 = vector.shape_cast %635 : vector<14xf32> to vector<14x1xf32>
    %cst_50 = arith.constant dense<0.000000e+00> : vector<1xf32>
    %637 = vector.multi_reduction <add>, %636, %cst_50 [0] : vector<14x1xf32> to vector<1xf32>
    %638 = vector.shape_cast %637 : vector<1xf32> to vector<1x1xf32>
    %cst_51 = arith.constant 0.00255102036 : f32
    %639 = vector.broadcast %cst_51 : f32 to vector<1x1xf32>
    %640 = arith.mulf %633, %639 : vector<1x1xf32>
    %cst_52 = arith.constant 0.00255102036 : f32
    %641 = vector.broadcast %cst_52 : f32 to vector<1x1xf32>
    %642 = arith.mulf %638, %641 : vector<1x1xf32>
    %643 = arith.mulf %640, %640 : vector<1x1xf32>
    %644 = arith.subf %642, %643 : vector<1x1xf32>
    %cst_53 = arith.constant 9.99999974E-6 : f32
    %645 = vector.broadcast %cst_53 : f32 to vector<1x1xf32>
    %646 = arith.addf %644, %645 : vector<1x1xf32>
    %647 = math.rsqrt %646 : vector<1x1xf32>
    %648 = vector.broadcast %626 : f32 to vector<1x1xf32>
    %649 = arith.mulf %648, %647 : vector<1x1xf32>
    %650 = arith.mulf %640, %649 : vector<1x1xf32>
    %651 = vector.broadcast %627 : f32 to vector<1x1xf32>
    %652 = arith.subf %651, %650 : vector<1x1xf32>
    %653 = vector.broadcast %649 : vector<1x1xf32> to vector<14x128xf32>
    %654 = arith.mulf %622, %653 : vector<14x128xf32>
    %655 = vector.broadcast %652 : vector<1x1xf32> to vector<14x128xf32>
    %656 = arith.addf %654, %655 : vector<14x128xf32>
    %cst_54 = arith.constant 0.000000e+00 : f32
    %657 = vector.broadcast %cst_54 : f32 to vector<14x128xf32>
    %658 = arith.maximumf %656, %657 : vector<14x128xf32>
    %659 = vector.extract_strided_slice %658 {offsets = [0, 0], sizes = [1, 128], strides = [1, 1]} : vector<14x128xf32> to vector<1x128xf32>
    %660 = vector.extract_strided_slice %658 {offsets = [13, 0], sizes = [1, 128], strides = [1, 1]} : vector<14x128xf32> to vector<1x128xf32>
    %661 = tpu.concatenate %659, %658, %660 in 0 : vector<1x128xf32>, vector<14x128xf32>, vector<1x128xf32> -> vector<16x128xf32>
    %c1_i32_55 = arith.constant 1 : i32
    %662 = tpu.dynamic_rotate %661 by %c1_i32_55 dim 1 : vector<16x128xf32>, i32 -> vector<16x128xf32>
    %c2_i32_56 = arith.constant 2 : i32
    %663 = tpu.dynamic_rotate %661 by %c2_i32_56 dim 1 : vector<16x128xf32>, i32 -> vector<16x128xf32>
    %664 = arith.select %31, %663, %662 : vector<16x128xi1>, vector<16x128xf32>
    %665 = arith.select %27, %661, %664 : vector<16x128xi1>, vector<16x128xf32>
    %c117 = arith.constant 117 : index
    %666 = memref.load %arg1[%c117] : memref<129xf32, #tpu.memory_space<smem>>
    %c119 = arith.constant 119 : index
    %667 = memref.load %arg1[%c119] : memref<129xf32, #tpu.memory_space<smem>>
    %cst_57 = arith.constant 0.000000e+00 : f32
    %668 = vector.broadcast %cst_57 : f32 to vector<14x128xf32>
    %669 = arith.select %23, %625, %668 : vector<14x128xi1>, vector<14x128xf32>
    %cst_58 = arith.constant dense<0.000000e+00> : vector<14xf32>
    %670 = vector.multi_reduction <add>, %669, %cst_58 [1] : vector<14x128xf32> to vector<14xf32>
    %671 = vector.shape_cast %670 : vector<14xf32> to vector<14x1xf32>
    %cst_59 = arith.constant dense<0.000000e+00> : vector<1xf32>
    %672 = vector.multi_reduction <add>, %671, %cst_59 [0] : vector<14x1xf32> to vector<1xf32>
    %673 = vector.shape_cast %672 : vector<1xf32> to vector<1x1xf32>
    %674 = arith.mulf %669, %669 : vector<14x128xf32>
    %cst_60 = arith.constant dense<0.000000e+00> : vector<14xf32>
    %675 = vector.multi_reduction <add>, %674, %cst_60 [1] : vector<14x128xf32> to vector<14xf32>
    %676 = vector.shape_cast %675 : vector<14xf32> to vector<14x1xf32>
    %cst_61 = arith.constant dense<0.000000e+00> : vector<1xf32>
    %677 = vector.multi_reduction <add>, %676, %cst_61 [0] : vector<14x1xf32> to vector<1xf32>
    %678 = vector.shape_cast %677 : vector<1xf32> to vector<1x1xf32>
    %cst_62 = arith.constant 0.00255102036 : f32
    %679 = vector.broadcast %cst_62 : f32 to vector<1x1xf32>
    %680 = arith.mulf %673, %679 : vector<1x1xf32>
    %cst_63 = arith.constant 0.00255102036 : f32
    %681 = vector.broadcast %cst_63 : f32 to vector<1x1xf32>
    %682 = arith.mulf %678, %681 : vector<1x1xf32>
    %683 = arith.mulf %680, %680 : vector<1x1xf32>
    %684 = arith.subf %682, %683 : vector<1x1xf32>
    %cst_64 = arith.constant 9.99999974E-6 : f32
    %685 = vector.broadcast %cst_64 : f32 to vector<1x1xf32>
    %686 = arith.addf %684, %685 : vector<1x1xf32>
    %687 = math.rsqrt %686 : vector<1x1xf32>
    %688 = vector.broadcast %666 : f32 to vector<1x1xf32>
    %689 = arith.mulf %688, %687 : vector<1x1xf32>
    %690 = arith.mulf %680, %689 : vector<1x1xf32>
    %691 = vector.broadcast %667 : f32 to vector<1x1xf32>
    %692 = arith.subf %691, %690 : vector<1x1xf32>
    %693 = vector.broadcast %689 : vector<1x1xf32> to vector<14x128xf32>
    %694 = arith.mulf %625, %693 : vector<14x128xf32>
    %695 = vector.broadcast %692 : vector<1x1xf32> to vector<14x128xf32>
    %696 = arith.addf %694, %695 : vector<14x128xf32>
    %cst_65 = arith.constant 0.000000e+00 : f32
    %697 = vector.broadcast %cst_65 : f32 to vector<14x128xf32>
    %698 = arith.maximumf %696, %697 : vector<14x128xf32>
    %699 = vector.extract_strided_slice %698 {offsets = [0, 0], sizes = [1, 128], strides = [1, 1]} : vector<14x128xf32> to vector<1x128xf32>
    %700 = vector.extract_strided_slice %698 {offsets = [13, 0], sizes = [1, 128], strides = [1, 1]} : vector<14x128xf32> to vector<1x128xf32>
    %701 = tpu.concatenate %699, %698, %700 in 0 : vector<1x128xf32>, vector<14x128xf32>, vector<1x128xf32> -> vector<16x128xf32>
    %c1_i32_66 = arith.constant 1 : i32
    %702 = tpu.dynamic_rotate %701 by %c1_i32_66 dim 1 : vector<16x128xf32>, i32 -> vector<16x128xf32>
    %c2_i32_67 = arith.constant 2 : i32
    %703 = tpu.dynamic_rotate %701 by %c2_i32_67 dim 1 : vector<16x128xf32>, i32 -> vector<16x128xf32>
    %704 = arith.select %31, %703, %702 : vector<16x128xi1>, vector<16x128xf32>
    %705 = arith.select %27, %701, %704 : vector<16x128xi1>, vector<16x128xf32>
    %c120 = arith.constant 120 : index
    %706 = memref.load %arg1[%c120] : memref<129xf32, #tpu.memory_space<smem>>
    %707 = vector.broadcast %706 : f32 to vector<16x128xf32>
    %708 = arith.mulf %665, %707 : vector<16x128xf32>
    %c121 = arith.constant 121 : index
    %709 = memref.load %arg1[%c121] : memref<129xf32, #tpu.memory_space<smem>>
    %710 = vector.broadcast %709 : f32 to vector<16x128xf32>
    %711 = arith.mulf %705, %710 : vector<16x128xf32>
    %712 = arith.addf %708, %711 : vector<16x128xf32>
    %c126 = arith.constant 126 : index
    %713 = memref.load %arg1[%c126] : memref<129xf32, #tpu.memory_space<smem>>
    %714 = vector.broadcast %713 : f32 to vector<16x128xf32>
    %715 = arith.addf %712, %714 : vector<16x128xf32>
    %c122 = arith.constant 122 : index
    %716 = memref.load %arg1[%c122] : memref<129xf32, #tpu.memory_space<smem>>
    %717 = vector.broadcast %716 : f32 to vector<16x128xf32>
    %718 = arith.mulf %665, %717 : vector<16x128xf32>
    %c123 = arith.constant 123 : index
    %719 = memref.load %arg1[%c123] : memref<129xf32, #tpu.memory_space<smem>>
    %720 = vector.broadcast %719 : f32 to vector<16x128xf32>
    %721 = arith.mulf %705, %720 : vector<16x128xf32>
    %722 = arith.addf %718, %721 : vector<16x128xf32>
    %c127 = arith.constant 127 : index
    %723 = memref.load %arg1[%c127] : memref<129xf32, #tpu.memory_space<smem>>
    %724 = vector.broadcast %723 : f32 to vector<16x128xf32>
    %725 = arith.addf %722, %724 : vector<16x128xf32>
    %c124 = arith.constant 124 : index
    %726 = memref.load %arg1[%c124] : memref<129xf32, #tpu.memory_space<smem>>
    %727 = vector.broadcast %726 : f32 to vector<16x128xf32>
    %728 = arith.mulf %665, %727 : vector<16x128xf32>
    %c125 = arith.constant 125 : index
    %729 = memref.load %arg1[%c125] : memref<129xf32, #tpu.memory_space<smem>>
    %730 = vector.broadcast %729 : f32 to vector<16x128xf32>
    %731 = arith.mulf %705, %730 : vector<16x128xf32>
    %732 = arith.addf %728, %731 : vector<16x128xf32>
    %c128 = arith.constant 128 : index
    %733 = memref.load %arg1[%c128] : memref<129xf32, #tpu.memory_space<smem>>
    %734 = vector.broadcast %733 : f32 to vector<16x128xf32>
    %735 = arith.addf %732, %734 : vector<16x128xf32>
    %736 = tpu.concatenate %715, %725, %735 in 1 : vector<16x128xf32>, vector<16x128xf32>, vector<16x128xf32> -> vector<16x384xf32>
    %c0_68 = arith.constant 0 : index
    %c0_69 = arith.constant 0 : index
    %737 = vector.load %arg2[%c0_68, %c0_69] : memref<16x384xf32, #tpu.memory_space<vmem>>, vector<16x384xf32>
    tpu.vector_store %arg2[%c0_68, %c0_69], %736 {strides = array<i32>} : memref<16x384xf32, #tpu.memory_space<vmem>>, vector<16x384xf32>,
    return
  }
}

</mosaic_0001>

<llo_original>
// kernel: tpu_custom_call.1
$region0: #{tpu_custom_call.1}
  #allocation0 [shape = 'u32[]', space=smem, size = 0x4, offset = 0x4, fixed_abs, tag = 'smem constant byte address 0x4 - core index']
  #allocation1 [shape = 'u32[72,128]{1,0:T(1,128)}', space=vmem, size = 0x9000, scoped, tag = 'internal scratch']
  %s0 = inlined_call_operand.hbm [shape: f32[4,16,128], index: 0, kind: input, shape index: {}]
  %s1 = inlined_call_operand.hbm [shape: f32[129], index: 1, kind: input, shape index: {}]
  %s2 = inlined_call_operand.hbm [shape: f32[16,384], index: 2, kind: output, shape index: {}]
  %s3 = sld [smem:[#allocation0]]
  $region26: #{tpu_custom_call.1} parent=0
    _
  %s5 = ssub.s32 1, %s3
  %s6 = scalar_select 0, %s5, %s3
  $region1: #{tpu_custom_call.1} parent=0
    #allocation2 [shape = 'u8[32768]{0}', space=vmem, size = 0x8000, scoped, tag = 'input window, operand 0, single buffered']
    #allocation3 [shape = 's32[1]{0}', space=sflag, size = 0x4, scoped, tag = 'scoped memory for tpu_custom_call.1']
    #allocation4 [shape = 's32[1]{0}', space=sflag, size = 0x4, scoped, tag = 'scoped memory for tpu_custom_call.1']
    #allocation5 [shape = 's32[1]{0}', space=sflag, size = 0x4, scoped, tag = 'scoped memory for tpu_custom_call.1']
    #allocation6 [shape = 'u8[1024]{0}', space=smem, size = 0x400, scoped, tag = 'input window, operand 1, single buffered']
    #allocation7 [shape = 'u8[24576]{0}', space=vmem, size = 0x6000, scoped, tag = 'output window, operand 0, single buffered']
    %7 = vsyncpa [#allocation3], 0
    %8 = vsyncpa [#allocation5], 0
    %9 = vsyncpa [#allocation4], 0
    // Predicated region
    $region2: #{tpu_custom_call.1} parent=1 // pred_check
      _
    $region3: #{tpu_custom_call.1} parent=1 // pred_check_branch
      %11 = sbr.rel (0) target = $region5
    $region4: #{tpu_custom_call.1} parent=1 // pred_region
      %13 = vsyncadd [#allocation3], 0
      %s14 = sshll.u32 %s0, 4
      %s15 = int_to_ptr.hbm [resolvable:$true] %s14
      %s16 = sshll.u32 [#allocation2], 4
      %s17 = int_to_ptr.vmem [resolvable:$true] %s16
      %22 = dma.hbm_to_vmem [thread:$0]  %s15, 1024, %s17, [#allocation3], 128, 128, 8
    $region5: #{tpu_custom_call.1} parent=1 // pred_fallthru
      _
    // Predicated region
    $region6: #{tpu_custom_call.1} parent=1 // pred_check
      _
    $region7: #{tpu_custom_call.1} parent=1 // pred_check_branch
      %24 = sbr.rel (0) target = $region9
    $region8: #{tpu_custom_call.1} parent=1 // pred_region
      %26 = vsyncadd [#allocation5], 0
      %s28 = sshll.u32 %s1, 4
      %s29 = int_to_ptr.hbm [resolvable:$true] %s28
      %31 = dma.hbm_to_smem %s29, 32, [#allocation6], [#allocation5]
    $region9: #{tpu_custom_call.1} parent=1 // pred_fallthru
      _
    // Predicated region
    $region10: #{tpu_custom_call.1} parent=1 // pred_check
      _
    $region11: #{tpu_custom_call.1} parent=1 // pred_check_branch
      %33 = sbr.rel (0) target = $region13
    $region12: #{tpu_custom_call.1} parent=1 // pred_region
      %35 = dma.done [#allocation3], 1024
    $region13: #{tpu_custom_call.1} parent=1 // pred_fallthru
      _
    // Predicated region
    $region14: #{tpu_custom_call.1} parent=1 // pred_check
      _
    $region15: #{tpu_custom_call.1} parent=1 // pred_check_branch
      %37 = sbr.rel (0) target = $region17
    $region16: #{tpu_custom_call.1} parent=1 // pred_region
      %39 = dma.done [#allocation5], 32
    $region17: #{tpu_custom_call.1} parent=1 // pred_fallthru
      _
    %40 = sfence
    %v41 = vlaneseq
    %v42 = vand.u32 %v41, 127
    %vm43 = vcmp.lt.s32.totalorder %v42, 0
    %v44 = vsub.s32 0, %v42
    %v45 = vsel %vm43, %v44, %v42
    %v46 = vshrl.u32 %v45, 4
    %v47 = vand.u32 %v45, 15
    %v48 = vsub.s32 0, %v47
    %v49 = vsel %vm43, %v48, %v47
    %vm50 = vcmp.ne.s32.totalorder %v49, 0
    %vm51 = vcmp.lt.s32.totalorder %v49, 0
    %vm52 = vmand %vm51, %vm50
    %v53 = vadd.s32 %v49, 16
    %v54 = vsel %vm52, %v53, %v49
    %vm55 = vcmp.lt.s32.totalorder %v42, 32
    %vm56 = vcmp.lt.s32.totalorder %v54, 14
    %vm57 = vmand %vm55, %vm56
    %v58 = vsel %vm57, 1, 0
    %vm59 = vcmp.eq.s32.totalorder %v58, 1
    %vm60 = vcmp.eq.s32.totalorder %v54, 0
    %v61 = vsel %vm60, 1, 0
    %vm62 = vcmp.eq.s32.totalorder %v61, 1
    %vm63 = vcmp.eq.s32.totalorder %v54, 15
    %v64 = vsel %vm63, 1, 0
    %vm65 = vcmp.eq.s32.totalorder %v64, 1
    %v66 = vld [vmem:[#allocation2] sm:$0xff]
    %v67 = vld [vmem:[#allocation2 + $0x8] sm:$0xff]
    %s68 = scalar_lea.vmem [#allocation2], 16
    %v69 = vld [vmem:[%s68] sm:$0xff]
    %v70 = vld [vmem:[%s68 + $0x8] sm:$0xff]
    %s71 = scalar_lea.vmem [#allocation2], 32
    %v72 = vld [vmem:[%s71] sm:$0xff]
    %v73 = vld [vmem:[%s71 + $0x8] sm:$0xff]
    %s74 = scalar_lea.vmem [#allocation2], 48
    %v75 = vld [vmem:[%s74] sm:$0xff]
    %v76 = vld [vmem:[%s74 + $0x8] sm:$0xff]
    %s77 = sld [smem:[#allocation6]]
    %v78 = vstv %s77
    %v79 = vmul.f32 %v66, %v78
    %v80 = vmul.f32 %v67, %v78
    %s81 = sld [smem:[#allocation6 + $0x24]]
    %v82 = vstv %s81
    %v83 = vmul.f32 %v66, %v82
    %v84 = vmul.f32 %v67, %v82
    %s85 = sld [smem:[#allocation6 + $0x3]]
    %v86 = vstv %s85
    %v87 = vmul.f32 %v66, %v86
    %v88 = vmul.f32 %v67, %v86
    %vm91 = vcmask 1046528
    %v92 = vrot.slane %v87, 1
    %v93 = vrot.slane %v88, 1
    %v94 = vsel %vm91, %v92, %v93
    %v97 = vadd.f32 %v79, %v94
    %v98 = vadd.f32 %v80, %v93
    %s99 = sld [smem:[#allocation6 + $0x27]]
    %v100 = vstv %s99
    %v101 = vmul.f32 %v66, %v100
    %v102 = vmul.f32 %v67, %v100
    %v105 = vrot.slane %v101, 1
    %v106 = vrot.slane %v102, 1
    %v107 = vsel %vm91, %v105, %v106
    %v110 = vadd.f32 %v83, %v107
    %v111 = vadd.f32 %v84, %v106
    %s112 = sld [smem:[#allocation6 + $0x6]]
    %v113 = vstv %s112
    %v114 = vmul.f32 %v66, %v113
    %v115 = vmul.f32 %v67, %v113
    %vm118 = vcmask 1045504
    %v119 = vrot.slane %v114, 2
    %v120 = vrot.slane %v115, 2
    %v121 = vsel %vm118, %v119, %v120
    %v124 = vadd.f32 %v97, %v121
    %v125 = vadd.f32 %v98, %v120
    %s126 = sld [smem:[#allocation6 + $0x2a]]
    %v127 = vstv %s126
    %v128 = vmul.f32 %v66, %v127
    %v129 = vmul.f32 %v67, %v127
    %v132 = vrot.slane %v128, 2
    %v133 = vrot.slane %v129, 2
    %v134 = vsel %vm118, %v132, %v133
    %v137 = vadd.f32 %v110, %v134
    %v138 = vadd.f32 %v111, %v133
    %139 = vrot.lane.b32.xlu0 %v66, 127
    %v140 = vpop.permute.xlu0 %139
    %141 = vrot.lane.b32.xlu0 %v67, 127
    %v142 = vpop.permute.xlu0 %141
    %s143 = sld [smem:[#allocation6 + $0x1]]
    %v144 = vstv %s143
    %v145 = vmul.f32 %v140, %v144
    %v146 = vmul.f32 %v142, %v144
    %v147 = vadd.f32 %v124, %v145
    %v148 = vadd.f32 %v125, %v146
    %s149 = sld [smem:[#allocation6 + $0x25]]
    %v150 = vstv %s149
    %v151 = vmul.f32 %v140, %v150
    %v152 = vmul.f32 %v142, %v150
    %v153 = vadd.f32 %v137, %v151
    %v154 = vadd.f32 %v138, %v152
    %s155 = sld [smem:[#allocation6 + $0x4]]
    %v156 = vstv %s155
    %v157 = vmul.f32 %v140, %v156
    %v158 = vmul.f32 %v142, %v156
    %v161 = vrot.slane %v157, 1
    %v162 = vrot.slane %v158, 1
    %v163 = vsel %vm91, %v161, %v162
    %v166 = vadd.f32 %v147, %v163
    %v167 = vadd.f32 %v148, %v162
    %s168 = sld [smem:[#allocation6 + $0x28]]
    %v169 = vstv %s168
    %v170 = vmul.f32 %v140, %v169
    %v171 = vmul.f32 %v142, %v169
    %v174 = vrot.slane %v170, 1
    %v175 = vrot.slane %v171, 1
    %v176 = vsel %vm91, %v174, %v175
    %v179 = vadd.f32 %v153, %v176
    %v180 = vadd.f32 %v154, %v175
    %s181 = sld [smem:[#allocation6 + $0x7]]
    %v182 = vstv %s181
    %v183 = vmul.f32 %v140, %v182
    %v184 = vmul.f32 %v142, %v182
    %v187 = vrot.slane %v183, 2
    %v188 = vrot.slane %v184, 2
    %v189 = vsel %vm118, %v187, %v188
    %v192 = vadd.f32 %v166, %v189
    %v193 = vadd.f32 %v167, %v188
    %s194 = sld [smem:[#allocation6 + $0x2b]]
    %v195 = vstv %s194
    %v196 = vmul.f32 %v140, %v195
    %v197 = vmul.f32 %v142, %v195
    %v200 = vrot.slane %v196, 2
    %v201 = vrot.slane %v197, 2
    %v202 = vsel %vm118, %v200, %v201
    %v205 = vadd.f32 %v179, %v202
    %v206 = vadd.f32 %v180, %v201
    %207 = vrot.lane.b32.xlu0 %v66, 126
    %v208 = vpop.permute.xlu0 %207
    %209 = vrot.lane.b32.xlu0 %v67, 126
    %v210 = vpop.permute.xlu0 %209
    %s211 = sld [smem:[#allocation6 + $0x2]]
    %v212 = vstv %s211
    %v213 = vmul.f32 %v208, %v212
    %v214 = vmul.f32 %v210, %v212
    %v215 = vadd.f32 %v192, %v213
    %v216 = vadd.f32 %v193, %v214
    %s217 = sld [smem:[#allocation6 + $0x26]]
    %v218 = vstv %s217
    %v219 = vmul.f32 %v208, %v218
    %v220 = vmul.f32 %v210, %v218
    %v221 = vadd.f32 %v205, %v219
    %v222 = vadd.f32 %v206, %v220
    %s223 = sld [smem:[#allocation6 + $0x5]]
    %v224 = vstv %s223
    %v225 = vmul.f32 %v208, %v224
    %v226 = vmul.f32 %v210, %v224
    %v229 = vrot.slane %v225, 1
    %v230 = vrot.slane %v226, 1
    %v231 = vsel %vm91, %v229, %v230
    %v234 = vadd.f32 %v215, %v231
    %v235 = vadd.f32 %v216, %v230
    %s236 = sld [smem:[#allocation6 + $0x29]]
    %v237 = vstv %s236
    %v238 = vmul.f32 %v208, %v237
    %v239 = vmul.f32 %v210, %v237
    %v242 = vrot.slane %v238, 1
    %v243 = vrot.slane %v239, 1
    %v244 = vsel %vm91, %v242, %v243
    %v247 = vadd.f32 %v221, %v244
    %v248 = vadd.f32 %v222, %v243
    %s249 = sld [smem:[#allocation6 + $0x8]]
    %v250 = vstv %s249
    %v251 = vmul.f32 %v208, %v250
    %v252 = vmul.f32 %v210, %v250
    %v255 = vrot.slane %v251, 2
    %v256 = vrot.slane %v252, 2
    %v257 = vsel %vm118, %v255, %v256
    %v260 = vadd.f32 %v234, %v257
    %v261 = vadd.f32 %v235, %v256
    %s262 = sld [smem:[#allocation6 + $0x2c]]
    %v263 = vstv %s262
    %v264 = vmul.f32 %v208, %v263
    %v265 = vmul.f32 %v210, %v263
    %v268 = vrot.slane %v264, 2
    %v269 = vrot.slane %v265, 2
    %v270 = vsel %vm118, %v268, %v269
    %v273 = vadd.f32 %v247, %v270
    %v274 = vadd.f32 %v248, %v269
    %s275 = sld [smem:[#allocation6 + $0x9]]
    %v276 = vstv %s275
    %v277 = vmul.f32 %v69, %v276
    %v278 = vmul.f32 %v70, %v276
    %v279 = vadd.f32 %v260, %v277
    %v280 = vadd.f32 %v261, %v278
    %s281 = sld [smem:[#allocation6 + $0x2d]]
    %v282 = vstv %s281
    %v283 = vmul.f32 %v69, %v282
    %v284 = vmul.f32 %v70, %v282
    %v285 = vadd.f32 %v273, %v283
    %v286 = vadd.f32 %v274, %v284
    %s287 = sld [smem:[#allocation6 + $0xc]]
    %v288 = vstv %s287
    %v289 = vmul.f32 %v69, %v288
    %v290 = vmul.f32 %v70, %v288
    %v293 = vrot.slane %v289, 1
    %v294 = vrot.slane %v290, 1
    %v295 = vsel %vm91, %v293, %v294
    %v298 = vadd.f32 %v279, %v295
    %v299 = vadd.f32 %v280, %v294
    %s300 = sld [smem:[#allocation6 + $0x30]]
    %v301 = vstv %s300
    %v302 = vmul.f32 %v69, %v301
    %v303 = vmul.f32 %v70, %v301
    %v306 = vrot.slane %v302, 1
    %v307 = vrot.slane %v303, 1
    %v308 = vsel %vm91, %v306, %v307
    %v311 = vadd.f32 %v285, %v308
    %v312 = vadd.f32 %v286, %v307
    %s313 = sld [smem:[#allocation6 + $0xf]]
    %v314 = vstv %s313
    %v315 = vmul.f32 %v69, %v314
    %v316 = vmul.f32 %v70, %v314
    %v319 = vrot.slane %v315, 2
    %v320 = vrot.slane %v316, 2
    %v321 = vsel %vm118, %v319, %v320
    %v324 = vadd.f32 %v298, %v321
    %v325 = vadd.f32 %v299, %v320
    %s326 = sld [smem:[#allocation6 + $0x33]]
    %v327 = vstv %s326
    %v328 = vmul.f32 %v69, %v327
    %v329 = vmul.f32 %v70, %v327
    %v332 = vrot.slane %v328, 2
    %v333 = vrot.slane %v329, 2
    %v334 = vsel %vm118, %v332, %v333
    %v337 = vadd.f32 %v311, %v334
    %v338 = vadd.f32 %v312, %v333
    %339 = vrot.lane.b32.xlu0 %v69, 127
    %v340 = vpop.permute.xlu0 %339
    %341 = vrot.lane.b32.xlu0 %v70, 127
    %v342 = vpop.permute.xlu0 %341
    %s343 = sld [smem:[#allocation6 + $0xa]]
    %v344 = vstv %s343
    %v345 = vmul.f32 %v340, %v344
    %v346 = vmul.f32 %v342, %v344
    %v347 = vadd.f32 %v324, %v345
    %v348 = vadd.f32 %v325, %v346
    %s349 = sld [smem:[#allocation6 + $0x2e]]
    %v350 = vstv %s349
    %v351 = vmul.f32 %v340, %v350
    %v352 = vmul.f32 %v342, %v350
    %v353 = vadd.f32 %v337, %v351
    %v354 = vadd.f32 %v338, %v352
    %s355 = sld [smem:[#allocation6 + $0xd]]
    %v356 = vstv %s355
    %v357 = vmul.f32 %v340, %v356
    %v358 = vmul.f32 %v342, %v356
    %v361 = vrot.slane %v357, 1
    %v362 = vrot.slane %v358, 1
    %v363 = vsel %vm91, %v361, %v362
    %v366 = vadd.f32 %v347, %v363
    %v367 = vadd.f32 %v348, %v362
    %s368 = sld [smem:[#allocation6 + $0x31]]
    %v369 = vstv %s368
    %v370 = vmul.f32 %v340, %v369
    %v371 = vmul.f32 %v342, %v369
    %v374 = vrot.slane %v370, 1
    %v375 = vrot.slane %v371, 1
    %v376 = vsel %vm91, %v374, %v375
    %v379 = vadd.f32 %v353, %v376
    %v380 = vadd.f32 %v354, %v375
    %s381 = sld [smem:[#allocation6 + $0x10]]
    %v382 = vstv %s381
    %v383 = vmul.f32 %v340, %v382
    %v384 = vmul.f32 %v342, %v382
    %v387 = vrot.slane %v383, 2
    %v388 = vrot.slane %v384, 2
    %v389 = vsel %vm118, %v387, %v388
    %v392 = vadd.f32 %v366, %v389
    %v393 = vadd.f32 %v367, %v388
    %s394 = sld [smem:[#allocation6 + $0x34]]
    %v395 = vstv %s394
    %v396 = vmul.f32 %v340, %v395
    %v397 = vmul.f32 %v342, %v395
    %v400 = vrot.slane %v396, 2
    %v401 = vrot.slane %v397, 2
    %v402 = vsel %vm118, %v400, %v401
    %v405 = vadd.f32 %v379, %v402
    %v406 = vadd.f32 %v380, %v401
    %407 = vrot.lane.b32.xlu0 %v69, 126
    %v408 = vpop.permute.xlu0 %407
    %409 = vrot.lane.b32.xlu0 %v70, 126
    %v410 = vpop.permute.xlu0 %409
    %s411 = sld [smem:[#allocation6 + $0xb]]
    %v412 = vstv %s411
    %v413 = vmul.f32 %v408, %v412
    %v414 = vmul.f32 %v410, %v412
    %v415 = vadd.f32 %v392, %v413
    %v416 = vadd.f32 %v393, %v414
    %s417 = sld [smem:[#allocation6 + $0x2f]]
    %v418 = vstv %s417
    %v419 = vmul.f32 %v408, %v418
    %v420 = vmul.f32 %v410, %v418
    %v421 = vadd.f32 %v405, %v419
    %v422 = vadd.f32 %v406, %v420
    %s423 = sld [smem:[#allocation6 + $0xe]]
    %v424 = vstv %s423
    %v425 = vmul.f32 %v408, %v424
    %v426 = vmul.f32 %v410, %v424
    %v429 = vrot.slane %v425, 1
    %v430 = vrot.slane %v426, 1
    %v431 = vsel %vm91, %v429, %v430
    %v434 = vadd.f32 %v415, %v431
    %v435 = vadd.f32 %v416, %v430
    %s436 = sld [smem:[#allocation6 + $0x32]]
    %v437 = vstv %s436
    %v438 = vmul.f32 %v408, %v437
    %v439 = vmul.f32 %v410, %v437
    %v442 = vrot.slane %v438, 1
    %v443 = vrot.slane %v439, 1
    %v444 = vsel %vm91, %v442, %v443
    %v447 = vadd.f32 %v421, %v444
    %v448 = vadd.f32 %v422, %v443
    %s449 = sld [smem:[#allocation6 + $0x11]]
    %v450 = vstv %s449
    %v451 = vmul.f32 %v408, %v450
    %v452 = vmul.f32 %v410, %v450
    %v455 = vrot.slane %v451, 2
    %v456 = vrot.slane %v452, 2
    %v457 = vsel %vm118, %v455, %v456
    %v460 = vadd.f32 %v434, %v457
    %v461 = vadd.f32 %v435, %v456
    %s462 = sld [smem:[#allocation6 + $0x35]]
    %v463 = vstv %s462
    %v464 = vmul.f32 %v408, %v463
    %v465 = vmul.f32 %v410, %v463
    %v468 = vrot.slane %v464, 2
    %v469 = vrot.slane %v465, 2
    %v470 = vsel %vm118, %v468, %v469
    %v473 = vadd.f32 %v447, %v470
    %v474 = vadd.f32 %v448, %v469
    %s475 = sld [smem:[#allocation6 + $0x12]]
    %v476 = vstv %s475
    %v477 = vmul.f32 %v72, %v476
    %v478 = vmul.f32 %v73, %v476
    %v479 = vadd.f32 %v460, %v477
    %v480 = vadd.f32 %v461, %v478
    %s481 = sld [smem:[#allocation6 + $0x36]]
    %v482 = vstv %s481
    %v483 = vmul.f32 %v72, %v482
    %v484 = vmul.f32 %v73, %v482
    %v485 = vadd.f32 %v473, %v483
    %v486 = vadd.f32 %v474, %v484
    %s487 = sld [smem:[#allocation6 + $0x15]]
    %v488 = vstv %s487
    %v489 = vmul.f32 %v72, %v488
    %v490 = vmul.f32 %v73, %v488
    %v493 = vrot.slane %v489, 1
    %v494 = vrot.slane %v490, 1
    %v495 = vsel %vm91, %v493, %v494
    %v498 = vadd.f32 %v479, %v495
    %v499 = vadd.f32 %v480, %v494
    %s500 = sld [smem:[#allocation6 + $0x39]]
    %v501 = vstv %s500
    %v502 = vmul.f32 %v72, %v501
    %v503 = vmul.f32 %v73, %v501
    %v506 = vrot.slane %v502, 1
    %v507 = vrot.slane %v503, 1
    %v508 = vsel %vm91, %v506, %v507
    %v511 = vadd.f32 %v485, %v508
    %v512 = vadd.f32 %v486, %v507
    %s513 = sld [smem:[#allocation6 + $0x18]]
    %v514 = vstv %s513
    %v515 = vmul.f32 %v72, %v514
    %v516 = vmul.f32 %v73, %v514
    %v519 = vrot.slane %v515, 2
    %v520 = vrot.slane %v516, 2
    %v521 = vsel %vm118, %v519, %v520
    %v524 = vadd.f32 %v498, %v521
    %v525 = vadd.f32 %v499, %v520
    %s526 = sld [smem:[#allocation6 + $0x3c]]
    %v527 = vstv %s526
    %v528 = vmul.f32 %v72, %v527
    %v529 = vmul.f32 %v73, %v527
    %v532 = vrot.slane %v528, 2
    %v533 = vrot.slane %v529, 2
    %v534 = vsel %vm118, %v532, %v533
    %v537 = vadd.f32 %v511, %v534
    %v538 = vadd.f32 %v512, %v533
    %539 = vrot.lane.b32.xlu0 %v72, 127
    %v540 = vpop.permute.xlu0 %539
    %541 = vrot.lane.b32.xlu0 %v73, 127
    %v542 = vpop.permute.xlu0 %541
    %s543 = sld [smem:[#allocation6 + $0x13]]
    %v544 = vstv %s543
    %v545 = vmul.f32 %v540, %v544
    %v546 = vmul.f32 %v542, %v544
    %v547 = vadd.f32 %v524, %v545
    %v548 = vadd.f32 %v525, %v546
    %s549 = sld [smem:[#allocation6 + $0x37]]
    %v550 = vstv %s549
    %v551 = vmul.f32 %v540, %v550
    %v552 = vmul.f32 %v542, %v550
    %v553 = vadd.f32 %v537, %v551
    %v554 = vadd.f32 %v538, %v552
    %s555 = sld [smem:[#allocation6 + $0x16]]
    %v556 = vstv %s555
    %v557 = vmul.f32 %v540, %v556
    %v558 = vmul.f32 %v542, %v556
    %v561 = vrot.slane %v557, 1
    %v562 = vrot.slane %v558, 1
    %v563 = vsel %vm91, %v561, %v562
    %v566 = vadd.f32 %v547, %v563
    %v567 = vadd.f32 %v548, %v562
    %s568 = sld [smem:[#allocation6 + $0x3a]]
    %v569 = vstv %s568
    %v570 = vmul.f32 %v540, %v569
    %v571 = vmul.f32 %v542, %v569
    %v574 = vrot.slane %v570, 1
    %v575 = vrot.slane %v571, 1
    %v576 = vsel %vm91, %v574, %v575
    %v579 = vadd.f32 %v553, %v576
    %v580 = vadd.f32 %v554, %v575
    %s581 = sld [smem:[#allocation6 + $0x19]]
    %v582 = vstv %s581
    %v583 = vmul.f32 %v540, %v582
    %v584 = vmul.f32 %v542, %v582
    %v587 = vrot.slane %v583, 2
    %v588 = vrot.slane %v584, 2
    %v589 = vsel %vm118, %v587, %v588
    %v592 = vadd.f32 %v566, %v589
    %v593 = vadd.f32 %v567, %v588
    %s594 = sld [smem:[#allocation6 + $0x3d]]
    %v595 = vstv %s594
    %v596 = vmul.f32 %v540, %v595
    %v597 = vmul.f32 %v542, %v595
    %v600 = vrot.slane %v596, 2
    %v601 = vrot.slane %v597, 2
    %v602 = vsel %vm118, %v600, %v601
    %v605 = vadd.f32 %v579, %v602
    %v606 = vadd.f32 %v580, %v601
    %607 = vrot.lane.b32.xlu0 %v72, 126
    %v608 = vpop.permute.xlu0 %607
    %609 = vrot.lane.b32.xlu0 %v73, 126
    %v610 = vpop.permute.xlu0 %609
    %s611 = sld [smem:[#allocation6 + $0x14]]
    %v612 = vstv %s611
    %v613 = vmul.f32 %v608, %v612
    %v614 = vmul.f32 %v610, %v612
    %v615 = vadd.f32 %v592, %v613
    %v616 = vadd.f32 %v593, %v614
    %s617 = sld [smem:[#allocation6 + $0x38]]
    %v618 = vstv %s617
    %v619 = vmul.f32 %v608, %v618
    %v620 = vmul.f32 %v610, %v618
    %v621 = vadd.f32 %v605, %v619
    %v622 = vadd.f32 %v606, %v620
    %s623 = sld [smem:[#allocation6 + $0x17]]
    %v624 = vstv %s623
    %v625 = vmul.f32 %v608, %v624
    %v626 = vmul.f32 %v610, %v624
    %v629 = vrot.slane %v625, 1
    %v630 = vrot.slane %v626, 1
    %v631 = vsel %vm91, %v629, %v630
    %v634 = vadd.f32 %v615, %v631
    %v635 = vadd.f32 %v616, %v630
    %s636 = sld [smem:[#allocation6 + $0x3b]]
    %v637 = vstv %s636
    %v638 = vmul.f32 %v608, %v637
    %v639 = vmul.f32 %v610, %v637
    %v642 = vrot.slane %v638, 1
    %v643 = vrot.slane %v639, 1
    %v644 = vsel %vm91, %v642, %v643
    %v647 = vadd.f32 %v621, %v644
    %v648 = vadd.f32 %v622, %v643
    %s649 = sld [smem:[#allocation6 + $0x1a]]
    %v650 = vstv %s649
    %v651 = vmul.f32 %v608, %v650
    %v652 = vmul.f32 %v610, %v650
    %v655 = vrot.slane %v651, 2
    %v656 = vrot.slane %v652, 2
    %v657 = vsel %vm118, %v655, %v656
    %v660 = vadd.f32 %v634, %v657
    %v661 = vadd.f32 %v635, %v656
    %s662 = sld [smem:[#allocation6 + $0x3e]]
    %v663 = vstv %s662
    %v664 = vmul.f32 %v608, %v663
    %v665 = vmul.f32 %v610, %v663
    %v668 = vrot.slane %v664, 2
    %v669 = vrot.slane %v665, 2
    %v670 = vsel %vm118, %v668, %v669
    %v673 = vadd.f32 %v647, %v670
    %v674 = vadd.f32 %v648, %v669
    %s675 = sld [smem:[#allocation6 + $0x1b]]
    %v676 = vstv %s675
    %v677 = vmul.f32 %v75, %v676
    %v678 = vmul.f32 %v76, %v676
    %v679 = vadd.f32 %v660, %v677
    %v680 = vadd.f32 %v661, %v678
    %s681 = sld [smem:[#allocation6 + $0x3f]]
    %v682 = vstv %s681
    %v683 = vmul.f32 %v75, %v682
    %v684 = vmul.f32 %v76, %v682
    %v685 = vadd.f32 %v673, %v683
    %v686 = vadd.f32 %v674, %v684
    %s687 = sld [smem:[#allocation6 + $0x1e]]
    %v688 = vstv %s687
    %v689 = vmul.f32 %v75, %v688
    %v690 = vmul.f32 %v76, %v688
    %v693 = vrot.slane %v689, 1
    %v694 = vrot.slane %v690, 1
    %v695 = vsel %vm91, %v693, %v694
    %v698 = vadd.f32 %v679, %v695
    %v699 = vadd.f32 %v680, %v694
    %s700 = sld [smem:[#allocation6 + $0x42]]
    %v701 = vstv %s700
    %v702 = vmul.f32 %v75, %v701
    %v703 = vmul.f32 %v76, %v701
    %v706 = vrot.slane %v702, 1
    %v707 = vrot.slane %v703, 1
    %v708 = vsel %vm91, %v706, %v707
    %v711 = vadd.f32 %v685, %v708
    %v712 = vadd.f32 %v686, %v707
    %s713 = sld [smem:[#allocation6 + $0x21]]
    %v714 = vstv %s713
    %v715 = vmul.f32 %v75, %v714
    %v716 = vmul.f32 %v76, %v714
    %v719 = vrot.slane %v715, 2
    %v720 = vrot.slane %v716, 2
    %v721 = vsel %vm118, %v719, %v720
    %v724 = vadd.f32 %v698, %v721
    %v725 = vadd.f32 %v699, %v720
    %s726 = sld [smem:[#allocation6 + $0x45]]
    %v727 = vstv %s726
    %v728 = vmul.f32 %v75, %v727
    %v729 = vmul.f32 %v76, %v727
    %v732 = vrot.slane %v728, 2
    %v733 = vrot.slane %v729, 2
    %v734 = vsel %vm118, %v732, %v733
    %v737 = vadd.f32 %v711, %v734
    %v738 = vadd.f32 %v712, %v733
    %739 = vrot.lane.b32.xlu0 %v75, 127
    %v740 = vpop.permute.xlu0 %739
    %741 = vrot.lane.b32.xlu0 %v76, 127
    %v742 = vpop.permute.xlu0 %741
    %s743 = sld [smem:[#allocation6 + $0x1c]]
    %v744 = vstv %s743
    %v745 = vmul.f32 %v740, %v744
    %v746 = vmul.f32 %v742, %v744
    %v747 = vadd.f32 %v724, %v745
    %v748 = vadd.f32 %v725, %v746
    %s749 = sld [smem:[#allocation6 + $0x40]]
    %v750 = vstv %s749
    %v751 = vmul.f32 %v740, %v750
    %v752 = vmul.f32 %v742, %v750
    %v753 = vadd.f32 %v737, %v751
    %v754 = vadd.f32 %v738, %v752
    %s755 = sld [smem:[#allocation6 + $0x1f]]
    %v756 = vstv %s755
    %v757 = vmul.f32 %v740, %v756
    %v758 = vmul.f32 %v742, %v756
    %v761 = vrot.slane %v757, 1
    %v762 = vrot.slane %v758, 1
    %v763 = vsel %vm91, %v761, %v762
    %v766 = vadd.f32 %v747, %v763
    %v767 = vadd.f32 %v748, %v762
    %s768 = sld [smem:[#allocation6 + $0x43]]
    %v769 = vstv %s768
    %v770 = vmul.f32 %v740, %v769
    %v771 = vmul.f32 %v742, %v769
    %v774 = vrot.slane %v770, 1
    %v775 = vrot.slane %v771, 1
    %v776 = vsel %vm91, %v774, %v775
    %v779 = vadd.f32 %v753, %v776
    %v780 = vadd.f32 %v754, %v775
    %s781 = sld [smem:[#allocation6 + $0x22]]
    %v782 = vstv %s781
    %v783 = vmul.f32 %v740, %v782
    %v784 = vmul.f32 %v742, %v782
    %v787 = vrot.slane %v783, 2
    %v788 = vrot.slane %v784, 2
    %v789 = vsel %vm118, %v787, %v788
    %v792 = vadd.f32 %v766, %v789
    %v793 = vadd.f32 %v767, %v788
    %s794 = sld [smem:[#allocation6 + $0x46]]
    %v795 = vstv %s794
    %v796 = vmul.f32 %v740, %v795
    %v797 = vmul.f32 %v742, %v795
    %v800 = vrot.slane %v796, 2
    %v801 = vrot.slane %v797, 2
    %v802 = vsel %vm118, %v800, %v801
    %v805 = vadd.f32 %v779, %v802
    %v806 = vadd.f32 %v780, %v801
    %807 = vrot.lane.b32.xlu0 %v75, 126
    %v808 = vpop.permute.xlu0 %807
    %809 = vrot.lane.b32.xlu0 %v76, 126
    %v810 = vpop.permute.xlu0 %809
    %s811 = sld [smem:[#allocation6 + $0x1d]]
    %v812 = vstv %s811
    %v813 = vmul.f32 %v808, %v812
    %v814 = vmul.f32 %v810, %v812
    %v815 = vadd.f32 %v792, %v813
    %v816 = vadd.f32 %v793, %v814
    %s817 = sld [smem:[#allocation6 + $0x41]]
    %v818 = vstv %s817
    %v819 = vmul.f32 %v808, %v818
    %v820 = vmul.f32 %v810, %v818
    %v821 = vadd.f32 %v805, %v819
    %v822 = vadd.f32 %v806, %v820
    %s823 = sld [smem:[#allocation6 + $0x20]]
    %v824 = vstv %s823
    %v825 = vmul.f32 %v808, %v824
    %v826 = vmul.f32 %v810, %v824
    %v829 = vrot.slane %v825, 1
    %v830 = vrot.slane %v826, 1
    %v831 = vsel %vm91, %v829, %v830
    %v834 = vadd.f32 %v815, %v831
    %v835 = vadd.f32 %v816, %v830
    %s836 = sld [smem:[#allocation6 + $0x44]]
    %v837 = vstv %s836
    %v838 = vmul.f32 %v808, %v837
    %v839 = vmul.f32 %v810, %v837
    %v842 = vrot.slane %v838, 1
    %v843 = vrot.slane %v839, 1
    %v844 = vsel %vm91, %v842, %v843
    %v847 = vadd.f32 %v821, %v844
    %v848 = vadd.f32 %v822, %v843
    %s849 = sld [smem:[#allocation6 + $0x23]]
    %v850 = vstv %s849
    %v851 = vmul.f32 %v808, %v850
    %v852 = vmul.f32 %v810, %v850
    %v855 = vrot.slane %v851, 2
    %v856 = vrot.slane %v852, 2
    %v857 = vsel %vm118, %v855, %v856
    %v860 = vadd.f32 %v834, %v857
    %v861 = vadd.f32 %v835, %v856
    %s862 = sld [smem:[#allocation6 + $0x47]]
    %v863 = vstv %s862
    %v864 = vmul.f32 %v808, %v863
    %v865 = vmul.f32 %v810, %v863
    %v868 = vrot.slane %v864, 2
    %v869 = vrot.slane %v865, 2
    %v870 = vsel %vm118, %v868, %v869
    %v873 = vadd.f32 %v847, %v870
    %v874 = vadd.f32 %v848, %v869
    %s875 = sld [smem:[#allocation6 + $0x48]]
    %v876 = vstv %s875
    %v877 = vadd.f32 %v860, %v876
    %v878 = vadd.f32 %v861, %v876
    %s879 = sld [smem:[#allocation6 + $0x49]]
    %v880 = vstv %s879
    %v881 = vadd.f32 %v873, %v880
    %v882 = vadd.f32 %v874, %v880
    %s883 = sld [smem:[#allocation6 + $0x4a]]
    %s884 = sld [smem:[#allocation6 + $0x4c]]
    %v885 = vsel %vm59, %v877, 0.0
    %v886 = vsel %vm59, %v878, 0.0
    %887 = vadd.xlane.f32.xlu0 %v885
    %v888 = vpop.xlane.xlu0 %887
    %v889 = vsel %vm118, %v886, 0.0
    %890 = vadd.xlane.f32.xlu0 %v889
    %v891 = vpop.xlane.xlu0 %890
    %v892 = vsel %vm118, %v891, 0.0
    %v893 = vadd.f32 %v888, %v892
    %v894 = vrot.slane %v893, 4
    %v895 = vadd.f32 %v893, %v894
    %v896 = vrot.slane %v895, 2
    %v897 = vadd.f32 %v895, %v896
    %v898 = vrot.slane %v897, 1
    %v899 = vadd.f32 %v897, %v898
    %v900 = vmul.f32 %v885, %v885
    %v901 = vmul.f32 %v886, %v886
    %902 = vadd.xlane.f32.xlu0 %v900
    %v903 = vpop.xlane.xlu0 %902
    %v904 = vsel %vm118, %v901, 0.0
    %905 = vadd.xlane.f32.xlu0 %v904
    %v906 = vpop.xlane.xlu0 %905
    %v907 = vsel %vm118, %v906, 0.0
    %v908 = vadd.f32 %v903, %v907
    %v909 = vrot.slane %v908, 4
    %v910 = vadd.f32 %v908, %v909
    %v911 = vrot.slane %v910, 2
    %v912 = vadd.f32 %v910, %v911
    %v913 = vrot.slane %v912, 1
    %v914 = vadd.f32 %v912, %v913
    %v915 = vmul.f32 %v899, 0.0025510204
    %v916 = vmul.f32 %v914, 0.0025510204
    %v917 = vmul.f32 %v915, %v915
    %v918 = vsub.f32 %v916, %v917
    %v919 = vadd.f32 %v918, 1e-05
    %v920 = vrsqrt.pop %v919
    %v921 = vmul.f32 %v920, %v919
    %v922 = vmul.f32 %v921, %v920
    %v923 = vmul.f32 0.5, %v922
    %v924 = vsub.f32 1.5, %v923
    %v925 = vmul.f32 %v920, %v924
    %vm926 = vweird.f32 %v919
    %vm927 = vweird.f32 %v920
    %vm928 = vmor %vm926, %vm927
    %v929 = vsel %vm928, %v920, %v925
    %v930 = vstv %s883
    %v931 = vmul.f32 %v930, %v929
    %v932 = vmul.f32 %v915, %v931
    %v933 = vstv %s884
    %v934 = vsub.f32 %v933, %v932
    %v935 = vmul.f32 %v877, %v931
    %v936 = vmul.f32 %v878, %v931
    %v937 = vadd.f32 %v935, %v934
    %v938 = vadd.f32 %v936, %v934
    %v939 = vmax.f32 %v937, 0.0
    %v940 = vmax.f32 %v938, 0.0
    %vm943 = vcmask 1040384
    %v944 = vrot.slane %v939, 7
    %v945 = vrot.slane %v940, 7
    %v946 = vsel %vm943, %v944, %v945
    %v949 = vrot.slane %v940, 6
    %v951 = vsel %vm943, %v939, %v944
    %v952 = vsel %vm91, %v946, %v949
    %953 = vrot.lane.b32.xlu0 %v951, 1
    %v954 = vpop.permute.xlu0 %953
    %955 = vrot.lane.b32.xlu0 %v952, 1
    %v956 = vpop.permute.xlu0 %955
    %957 = vrot.lane.b32.xlu0 %v951, 2
    %v958 = vpop.permute.xlu0 %957
    %959 = vrot.lane.b32.xlu0 %v952, 2
    %v960 = vpop.permute.xlu0 %959
    %v961 = vsel %vm65, %v958, %v954
    %v962 = vsel %vm65, %v960, %v956
    %v963 = vsel %vm62, %v951, %v961
    %v964 = vsel %vm62, %v952, %v962
    %s965 = sld [smem:[#allocation6 + $0x4b]]
    %s966 = sld [smem:[#allocation6 + $0x4d]]
    %v967 = vsel %vm59, %v881, 0.0
    %v968 = vsel %vm59, %v882, 0.0
    %969 = vadd.xlane.f32.xlu0 %v967
    %v970 = vpop.xlane.xlu0 %969
    %v971 = vsel %vm118, %v968, 0.0
    %972 = vadd.xlane.f32.xlu0 %v971
    %v973 = vpop.xlane.xlu0 %972
    %v974 = vsel %vm118, %v973, 0.0
    %v975 = vadd.f32 %v970, %v974
    %v976 = vrot.slane %v975, 4
    %v977 = vadd.f32 %v975, %v976
    %v978 = vrot.slane %v977, 2
    %v979 = vadd.f32 %v977, %v978
    %v980 = vrot.slane %v979, 1
    %v981 = vadd.f32 %v979, %v980
    %v982 = vmul.f32 %v967, %v967
    %v983 = vmul.f32 %v968, %v968
    %984 = vadd.xlane.f32.xlu0 %v982
    %v985 = vpop.xlane.xlu0 %984
    %v986 = vsel %vm118, %v983, 0.0
    %987 = vadd.xlane.f32.xlu0 %v986
    %v988 = vpop.xlane.xlu0 %987
    %v989 = vsel %vm118, %v988, 0.0
    %v990 = vadd.f32 %v985, %v989
    %v991 = vrot.slane %v990, 4
    %v992 = vadd.f32 %v990, %v991
    %v993 = vrot.slane %v992, 2
    %v994 = vadd.f32 %v992, %v993
    %v995 = vrot.slane %v994, 1
    %v996 = vadd.f32 %v994, %v995
    %v997 = vmul.f32 %v981, 0.0025510204
    %v998 = vmul.f32 %v996, 0.0025510204
    %v999 = vmul.f32 %v997, %v997
    %v1000 = vsub.f32 %v998, %v999
    %v1001 = vadd.f32 %v1000, 1e-05
    %v1002 = vrsqrt.pop %v1001
    %v1003 = vmul.f32 %v1002, %v1001
    %v1004 = vmul.f32 %v1003, %v1002
    %v1005 = vmul.f32 0.5, %v1004
    %v1006 = vsub.f32 1.5, %v1005
    %v1007 = vmul.f32 %v1002, %v1006
    %vm1008 = vweird.f32 %v1001
    %vm1009 = vweird.f32 %v1002
    %vm1010 = vmor %vm1008, %vm1009
    %v1011 = vsel %vm1010, %v1002, %v1007
    %v1012 = vstv %s965
    %v1013 = vmul.f32 %v1012, %v1011
    %v1014 = vmul.f32 %v997, %v1013
    %v1015 = vstv %s966
    %v1016 = vsub.f32 %v1015, %v1014
    %v1017 = vmul.f32 %v881, %v1013
    %v1018 = vmul.f32 %v882, %v1013
    %v1019 = vadd.f32 %v1017, %v1016
    %v1020 = vadd.f32 %v1018, %v1016
    %v1021 = vmax.f32 %v1019, 0.0
    %v1022 = vmax.f32 %v1020, 0.0
    %v1025 = vrot.slane %v1021, 7
    %v1026 = vrot.slane %v1022, 7
    %v1027 = vsel %vm943, %v1025, %v1026
    %v1030 = vrot.slane %v1022, 6
    %v1032 = vsel %vm943, %v1021, %v1025
    %v1033 = vsel %vm91, %v1027, %v1030
    %1034 = vrot.lane.b32.xlu0 %v1032, 1
    %v1035 = vpop.permute.xlu0 %1034
    %1036 = vrot.lane.b32.xlu0 %v1033, 1
    %v1037 = vpop.permute.xlu0 %1036
    %1038 = vrot.lane.b32.xlu0 %v1032, 2
    %v1039 = vpop.permute.xlu0 %1038
    %1040 = vrot.lane.b32.xlu0 %v1033, 2
    %v1041 = vpop.permute.xlu0 %1040
    %v1042 = vsel %vm65, %v1039, %v1035
    %v1043 = vsel %vm65, %v1041, %v1037
    %v1044 = vsel %vm62, %v1032, %v1042
    %v1045 = vsel %vm62, %v1033, %v1043
    %s1046 = sld [smem:[#allocation6 + $0x4e]]
    %v1047 = vstv %s1046
    %v1048 = vmul.f32 %v963, %v1047
    %v1049 = vmul.f32 %v964, %v1047
    %s1050 = sld [smem:[#allocation6 + $0x60]]
    %v1051 = vstv %s1050
    %v1052 = vmul.f32 %v963, %v1051
    %v1053 = vmul.f32 %v964, %v1051
    %s1054 = sld [smem:[#allocation6 + $0x51]]
    %v1055 = vstv %s1054
    %v1056 = vmul.f32 %v963, %v1055
    %v1057 = vmul.f32 %v964, %v1055
    %v1060 = vrot.slane %v1056, 1
    %v1061 = vrot.slane %v1057, 1
    %v1062 = vsel %vm91, %v1060, %v1061
    %v1065 = vadd.f32 %v1048, %v1062
    %v1066 = vadd.f32 %v1049, %v1061
    %s1067 = sld [smem:[#allocation6 + $0x63]]
    %v1068 = vstv %s1067
    %v1069 = vmul.f32 %v963, %v1068
    %v1070 = vmul.f32 %v964, %v1068
    %v1073 = vrot.slane %v1069, 1
    %v1074 = vrot.slane %v1070, 1
    %v1075 = vsel %vm91, %v1073, %v1074
    %v1078 = vadd.f32 %v1052, %v1075
    %v1079 = vadd.f32 %v1053, %v1074
    %s1080 = sld [smem:[#allocation6 + $0x54]]
    %v1081 = vstv %s1080
    %v1082 = vmul.f32 %v963, %v1081
    %v1083 = vmul.f32 %v964, %v1081
    %v1086 = vrot.slane %v1082, 2
    %v1087 = vrot.slane %v1083, 2
    %v1088 = vsel %vm118, %v1086, %v1087
    %v1091 = vadd.f32 %v1065, %v1088
    %v1092 = vadd.f32 %v1066, %v1087
    %s1093 = sld [smem:[#allocation6 + $0x66]]
    %v1094 = vstv %s1093
    %v1095 = vmul.f32 %v963, %v1094
    %v1096 = vmul.f32 %v964, %v1094
    %v1099 = vrot.slane %v1095, 2
    %v1100 = vrot.slane %v1096, 2
    %v1101 = vsel %vm118, %v1099, %v1100
    %v1104 = vadd.f32 %v1078, %v1101
    %v1105 = vadd.f32 %v1079, %v1100
    %1106 = vrot.lane.b32.xlu0 %v963, 127
    %v1107 = vpop.permute.xlu0 %1106
    %1108 = vrot.lane.b32.xlu0 %v964, 127
    %v1109 = vpop.permute.xlu0 %1108
    %s1110 = sld [smem:[#allocation6 + $0x4f]]
    %v1111 = vstv %s1110
    %v1112 = vmul.f32 %v1107, %v1111
    %v1113 = vmul.f32 %v1109, %v1111
    %v1114 = vadd.f32 %v1091, %v1112
    %v1115 = vadd.f32 %v1092, %v1113
    %s1116 = sld [smem:[#allocation6 + $0x61]]
    %v1117 = vstv %s1116
    %v1118 = vmul.f32 %v1107, %v1117
    %v1119 = vmul.f32 %v1109, %v1117
    %v1120 = vadd.f32 %v1104, %v1118
    %v1121 = vadd.f32 %v1105, %v1119
    %s1122 = sld [smem:[#allocation6 + $0x52]]
    %v1123 = vstv %s1122
    %v1124 = vmul.f32 %v1107, %v1123
    %v1125 = vmul.f32 %v1109, %v1123
    %v1128 = vrot.slane %v1124, 1
    %v1129 = vrot.slane %v1125, 1
    %v1130 = vsel %vm91, %v1128, %v1129
    %v1133 = vadd.f32 %v1114, %v1130
    %v1134 = vadd.f32 %v1115, %v1129
    %s1135 = sld [smem:[#allocation6 + $0x64]]
    %v1136 = vstv %s1135
    %v1137 = vmul.f32 %v1107, %v1136
    %v1138 = vmul.f32 %v1109, %v1136
    %v1141 = vrot.slane %v1137, 1
    %v1142 = vrot.slane %v1138, 1
    %v1143 = vsel %vm91, %v1141, %v1142
    %v1146 = vadd.f32 %v1120, %v1143
    %v1147 = vadd.f32 %v1121, %v1142
    %s1148 = sld [smem:[#allocation6 + $0x55]]
    %v1149 = vstv %s1148
    %v1150 = vmul.f32 %v1107, %v1149
    %v1151 = vmul.f32 %v1109, %v1149
    %v1154 = vrot.slane %v1150, 2
    %v1155 = vrot.slane %v1151, 2
    %v1156 = vsel %vm118, %v1154, %v1155
    %v1159 = vadd.f32 %v1133, %v1156
    %v1160 = vadd.f32 %v1134, %v1155
    %s1161 = sld [smem:[#allocation6 + $0x67]]
    %v1162 = vstv %s1161
    %v1163 = vmul.f32 %v1107, %v1162
    %v1164 = vmul.f32 %v1109, %v1162
    %v1167 = vrot.slane %v1163, 2
    %v1168 = vrot.slane %v1164, 2
    %v1169 = vsel %vm118, %v1167, %v1168
    %v1172 = vadd.f32 %v1146, %v1169
    %v1173 = vadd.f32 %v1147, %v1168
    %1174 = vrot.lane.b32.xlu0 %v963, 126
    %v1175 = vpop.permute.xlu0 %1174
    %1176 = vrot.lane.b32.xlu0 %v964, 126
    %v1177 = vpop.permute.xlu0 %1176
    %s1178 = sld [smem:[#allocation6 + $0x50]]
    %v1179 = vstv %s1178
    %v1180 = vmul.f32 %v1175, %v1179
    %v1181 = vmul.f32 %v1177, %v1179
    %v1182 = vadd.f32 %v1159, %v1180
    %v1183 = vadd.f32 %v1160, %v1181
    %s1184 = sld [smem:[#allocation6 + $0x62]]
    %v1185 = vstv %s1184
    %v1186 = vmul.f32 %v1175, %v1185
    %v1187 = vmul.f32 %v1177, %v1185
    %v1188 = vadd.f32 %v1172, %v1186
    %v1189 = vadd.f32 %v1173, %v1187
    %s1190 = sld [smem:[#allocation6 + $0x53]]
    %v1191 = vstv %s1190
    %v1192 = vmul.f32 %v1175, %v1191
    %v1193 = vmul.f32 %v1177, %v1191
    %v1196 = vrot.slane %v1192, 1
    %v1197 = vrot.slane %v1193, 1
    %v1198 = vsel %vm91, %v1196, %v1197
    %v1201 = vadd.f32 %v1182, %v1198
    %v1202 = vadd.f32 %v1183, %v1197
    %s1203 = sld [smem:[#allocation6 + $0x65]]
    %v1204 = vstv %s1203
    %v1205 = vmul.f32 %v1175, %v1204
    %v1206 = vmul.f32 %v1177, %v1204
    %v1209 = vrot.slane %v1205, 1
    %v1210 = vrot.slane %v1206, 1
    %v1211 = vsel %vm91, %v1209, %v1210
    %v1214 = vadd.f32 %v1188, %v1211
    %v1215 = vadd.f32 %v1189, %v1210
    %s1216 = sld [smem:[#allocation6 + $0x56]]
    %v1217 = vstv %s1216
    %v1218 = vmul.f32 %v1175, %v1217
    %v1219 = vmul.f32 %v1177, %v1217
    %v1222 = vrot.slane %v1218, 2
    %v1223 = vrot.slane %v1219, 2
    %v1224 = vsel %vm118, %v1222, %v1223
    %v1227 = vadd.f32 %v1201, %v1224
    %v1228 = vadd.f32 %v1202, %v1223
    %s1229 = sld [smem:[#allocation6 + $0x68]]
    %v1230 = vstv %s1229
    %v1231 = vmul.f32 %v1175, %v1230
    %v1232 = vmul.f32 %v1177, %v1230
    %v1235 = vrot.slane %v1231, 2
    %v1236 = vrot.slane %v1232, 2
    %v1237 = vsel %vm118, %v1235, %v1236
    %v1240 = vadd.f32 %v1214, %v1237
    %v1241 = vadd.f32 %v1215, %v1236
    %s1242 = sld [smem:[#allocation6 + $0x57]]
    %v1243 = vstv %s1242
    %v1244 = vmul.f32 %v1044, %v1243
    %v1245 = vmul.f32 %v1045, %v1243
    %v1246 = vadd.f32 %v1227, %v1244
    %v1247 = vadd.f32 %v1228, %v1245
    %s1248 = sld [smem:[#allocation6 + $0x69]]
    %v1249 = vstv %s1248
    %v1250 = vmul.f32 %v1044, %v1249
    %v1251 = vmul.f32 %v1045, %v1249
    %v1252 = vadd.f32 %v1240, %v1250
    %v1253 = vadd.f32 %v1241, %v1251
    %s1254 = sld [smem:[#allocation6 + $0x5a]]
    %v1255 = vstv %s1254
    %v1256 = vmul.f32 %v1044, %v1255
    %v1257 = vmul.f32 %v1045, %v1255
    %v1260 = vrot.slane %v1256, 1
    %v1261 = vrot.slane %v1257, 1
    %v1262 = vsel %vm91, %v1260, %v1261
    %v1265 = vadd.f32 %v1246, %v1262
    %v1266 = vadd.f32 %v1247, %v1261
    %s1267 = sld [smem:[#allocation6 + $0x6c]]
    %v1268 = vstv %s1267
    %v1269 = vmul.f32 %v1044, %v1268
    %v1270 = vmul.f32 %v1045, %v1268
    %v1273 = vrot.slane %v1269, 1
    %v1274 = vrot.slane %v1270, 1
    %v1275 = vsel %vm91, %v1273, %v1274
    %v1278 = vadd.f32 %v1252, %v1275
    %v1279 = vadd.f32 %v1253, %v1274
    %s1280 = sld [smem:[#allocation6 + $0x5d]]
    %v1281 = vstv %s1280
    %v1282 = vmul.f32 %v1044, %v1281
    %v1283 = vmul.f32 %v1045, %v1281
    %v1286 = vrot.slane %v1282, 2
    %v1287 = vrot.slane %v1283, 2
    %v1288 = vsel %vm118, %v1286, %v1287
    %v1291 = vadd.f32 %v1265, %v1288
    %v1292 = vadd.f32 %v1266, %v1287
    %s1293 = sld [smem:[#allocation6 + $0x6f]]
    %v1294 = vstv %s1293
    %v1295 = vmul.f32 %v1044, %v1294
    %v1296 = vmul.f32 %v1045, %v1294
    %v1299 = vrot.slane %v1295, 2
    %v1300 = vrot.slane %v1296, 2
    %v1301 = vsel %vm118, %v1299, %v1300
    %v1304 = vadd.f32 %v1278, %v1301
    %v1305 = vadd.f32 %v1279, %v1300
    %1306 = vrot.lane.b32.xlu0 %v1044, 127
    %v1307 = vpop.permute.xlu0 %1306
    %1308 = vrot.lane.b32.xlu0 %v1045, 127
    %v1309 = vpop.permute.xlu0 %1308
    %s1310 = sld [smem:[#allocation6 + $0x58]]
    %v1311 = vstv %s1310
    %v1312 = vmul.f32 %v1307, %v1311
    %v1313 = vmul.f32 %v1309, %v1311
    %v1314 = vadd.f32 %v1291, %v1312
    %v1315 = vadd.f32 %v1292, %v1313
    %s1316 = sld [smem:[#allocation6 + $0x6a]]
    %v1317 = vstv %s1316
    %v1318 = vmul.f32 %v1307, %v1317
    %v1319 = vmul.f32 %v1309, %v1317
    %v1320 = vadd.f32 %v1304, %v1318
    %v1321 = vadd.f32 %v1305, %v1319
    %s1322 = sld [smem:[#allocation6 + $0x5b]]
    %v1323 = vstv %s1322
    %v1324 = vmul.f32 %v1307, %v1323
    %v1325 = vmul.f32 %v1309, %v1323
    %v1328 = vrot.slane %v1324, 1
    %v1329 = vrot.slane %v1325, 1
    %v1330 = vsel %vm91, %v1328, %v1329
    %v1333 = vadd.f32 %v1314, %v1330
    %v1334 = vadd.f32 %v1315, %v1329
    %s1335 = sld [smem:[#allocation6 + $0x6d]]
    %v1336 = vstv %s1335
    %v1337 = vmul.f32 %v1307, %v1336
    %v1338 = vmul.f32 %v1309, %v1336
    %v1341 = vrot.slane %v1337, 1
    %v1342 = vrot.slane %v1338, 1
    %v1343 = vsel %vm91, %v1341, %v1342
    %v1346 = vadd.f32 %v1320, %v1343
    %v1347 = vadd.f32 %v1321, %v1342
    %s1348 = sld [smem:[#allocation6 + $0x5e]]
    %v1349 = vstv %s1348
    %v1350 = vmul.f32 %v1307, %v1349
    %v1351 = vmul.f32 %v1309, %v1349
    %v1354 = vrot.slane %v1350, 2
    %v1355 = vrot.slane %v1351, 2
    %v1356 = vsel %vm118, %v1354, %v1355
    %v1359 = vadd.f32 %v1333, %v1356
    %v1360 = vadd.f32 %v1334, %v1355
    %s1361 = sld [smem:[#allocation6 + $0x70]]
    %v1362 = vstv %s1361
    %v1363 = vmul.f32 %v1307, %v1362
    %v1364 = vmul.f32 %v1309, %v1362
    %v1367 = vrot.slane %v1363, 2
    %v1368 = vrot.slane %v1364, 2
    %v1369 = vsel %vm118, %v1367, %v1368
    %v1372 = vadd.f32 %v1346, %v1369
    %v1373 = vadd.f32 %v1347, %v1368
    %1374 = vrot.lane.b32.xlu0 %v1044, 126
    %v1375 = vpop.permute.xlu0 %1374
    %1376 = vrot.lane.b32.xlu0 %v1045, 126
    %v1377 = vpop.permute.xlu0 %1376
    %s1378 = sld [smem:[#allocation6 + $0x59]]
    %v1379 = vstv %s1378
    %v1380 = vmul.f32 %v1375, %v1379
    %v1381 = vmul.f32 %v1377, %v1379
    %v1382 = vadd.f32 %v1359, %v1380
    %v1383 = vadd.f32 %v1360, %v1381
    %s1384 = sld [smem:[#allocation6 + $0x6b]]
    %v1385 = vstv %s1384
    %v1386 = vmul.f32 %v1375, %v1385
    %v1387 = vmul.f32 %v1377, %v1385
    %v1388 = vadd.f32 %v1372, %v1386
    %v1389 = vadd.f32 %v1373, %v1387
    %s1390 = sld [smem:[#allocation6 + $0x5c]]
    %v1391 = vstv %s1390
    %v1392 = vmul.f32 %v1375, %v1391
    %v1393 = vmul.f32 %v1377, %v1391
    %v1396 = vrot.slane %v1392, 1
    %v1397 = vrot.slane %v1393, 1
    %v1398 = vsel %vm91, %v1396, %v1397
    %v1401 = vadd.f32 %v1382, %v1398
    %v1402 = vadd.f32 %v1383, %v1397
    %s1403 = sld [smem:[#allocation6 + $0x6e]]
    %v1404 = vstv %s1403
    %v1405 = vmul.f32 %v1375, %v1404
    %v1406 = vmul.f32 %v1377, %v1404
    %v1409 = vrot.slane %v1405, 1
    %v1410 = vrot.slane %v1406, 1
    %v1411 = vsel %vm91, %v1409, %v1410
    %v1414 = vadd.f32 %v1388, %v1411
    %v1415 = vadd.f32 %v1389, %v1410
    %s1416 = sld [smem:[#allocation6 + $0x5f]]
    %v1417 = vstv %s1416
    %v1418 = vmul.f32 %v1375, %v1417
    %v1419 = vmul.f32 %v1377, %v1417
    %v1422 = vrot.slane %v1418, 2
    %v1423 = vrot.slane %v1419, 2
    %v1424 = vsel %vm118, %v1422, %v1423
    %v1427 = vadd.f32 %v1401, %v1424
    %v1428 = vadd.f32 %v1402, %v1423
    %s1429 = sld [smem:[#allocation6 + $0x71]]
    %v1430 = vstv %s1429
    %v1431 = vmul.f32 %v1375, %v1430
    %v1432 = vmul.f32 %v1377, %v1430
    %v1435 = vrot.slane %v1431, 2
    %v1436 = vrot.slane %v1432, 2
    %v1437 = vsel %vm118, %v1435, %v1436
    %v1440 = vadd.f32 %v1414, %v1437
    %v1441 = vadd.f32 %v1415, %v1436
    %s1442 = sld [smem:[#allocation6 + $0x72]]
    %v1443 = vstv %s1442
    %v1444 = vadd.f32 %v1427, %v1443
    %v1445 = vadd.f32 %v1428, %v1443
    %s1446 = sld [smem:[#allocation6 + $0x73]]
    %v1447 = vstv %s1446
    %v1448 = vadd.f32 %v1440, %v1447
    %v1449 = vadd.f32 %v1441, %v1447
    %s1450 = sld [smem:[#allocation6 + $0x74]]
    %s1451 = sld [smem:[#allocation6 + $0x76]]
    %v1452 = vsel %vm59, %v1444, 0.0
    %v1453 = vsel %vm59, %v1445, 0.0
    %1454 = vadd.xlane.f32.xlu0 %v1452
    %v1455 = vpop.xlane.xlu0 %1454
    %v1456 = vsel %vm118, %v1453, 0.0
    %1457 = vadd.xlane.f32.xlu0 %v1456
    %v1458 = vpop.xlane.xlu0 %1457
    %v1459 = vsel %vm118, %v1458, 0.0
    %v1460 = vadd.f32 %v1455, %v1459
    %v1461 = vrot.slane %v1460, 4
    %v1462 = vadd.f32 %v1460, %v1461
    %v1463 = vrot.slane %v1462, 2
    %v1464 = vadd.f32 %v1462, %v1463
    %v1465 = vrot.slane %v1464, 1
    %v1466 = vadd.f32 %v1464, %v1465
    %v1467 = vmul.f32 %v1452, %v1452
    %v1468 = vmul.f32 %v1453, %v1453
    %1469 = vadd.xlane.f32.xlu0 %v1467
    %v1470 = vpop.xlane.xlu0 %1469
    %v1471 = vsel %vm118, %v1468, 0.0
    %1472 = vadd.xlane.f32.xlu0 %v1471
    %v1473 = vpop.xlane.xlu0 %1472
    %v1474 = vsel %vm118, %v1473, 0.0
    %v1475 = vadd.f32 %v1470, %v1474
    %v1476 = vrot.slane %v1475, 4
    %v1477 = vadd.f32 %v1475, %v1476
    %v1478 = vrot.slane %v1477, 2
    %v1479 = vadd.f32 %v1477, %v1478
    %v1480 = vrot.slane %v1479, 1
    %v1481 = vadd.f32 %v1479, %v1480
    %v1482 = vmul.f32 %v1466, 0.0025510204
    %v1483 = vmul.f32 %v1481, 0.0025510204
    %v1484 = vmul.f32 %v1482, %v1482
    %v1485 = vsub.f32 %v1483, %v1484
    %v1486 = vadd.f32 %v1485, 1e-05
    %v1487 = vrsqrt.pop %v1486
    %v1488 = vmul.f32 %v1487, %v1486
    %v1489 = vmul.f32 %v1488, %v1487
    %v1490 = vmul.f32 0.5, %v1489
    %v1491 = vsub.f32 1.5, %v1490
    %v1492 = vmul.f32 %v1487, %v1491
    %vm1493 = vweird.f32 %v1486
    %vm1494 = vweird.f32 %v1487
    %vm1495 = vmor %vm1493, %vm1494
    %v1496 = vsel %vm1495, %v1487, %v1492
    %v1497 = vstv %s1450
    %v1498 = vmul.f32 %v1497, %v1496
    %v1499 = vmul.f32 %v1482, %v1498
    %v1500 = vstv %s1451
    %v1501 = vsub.f32 %v1500, %v1499
    %v1502 = vmul.f32 %v1444, %v1498
    %v1503 = vmul.f32 %v1445, %v1498
    %v1504 = vadd.f32 %v1502, %v1501
    %v1505 = vadd.f32 %v1503, %v1501
    %v1506 = vmax.f32 %v1504, 0.0
    %v1507 = vmax.f32 %v1505, 0.0
    %v1510 = vrot.slane %v1506, 7
    %v1511 = vrot.slane %v1507, 7
    %v1512 = vsel %vm943, %v1510, %v1511
    %v1515 = vrot.slane %v1507, 6
    %v1517 = vsel %vm943, %v1506, %v1510
    %v1518 = vsel %vm91, %v1512, %v1515
    %1519 = vrot.lane.b32.xlu0 %v1517, 1
    %v1520 = vpop.permute.xlu0 %1519
    %1521 = vrot.lane.b32.xlu0 %v1518, 1
    %v1522 = vpop.permute.xlu0 %1521
    %1523 = vrot.lane.b32.xlu0 %v1517, 2
    %v1524 = vpop.permute.xlu0 %1523
    %1525 = vrot.lane.b32.xlu0 %v1518, 2
    %v1526 = vpop.permute.xlu0 %1525
    %v1527 = vsel %vm65, %v1524, %v1520
    %v1528 = vsel %vm65, %v1526, %v1522
    %v1529 = vsel %vm62, %v1517, %v1527
    %v1530 = vsel %vm62, %v1518, %v1528
    %s1531 = sld [smem:[#allocation6 + $0x75]]
    %s1532 = sld [smem:[#allocation6 + $0x77]]
    %v1533 = vsel %vm59, %v1448, 0.0
    %v1534 = vsel %vm59, %v1449, 0.0
    %1535 = vadd.xlane.f32.xlu0 %v1533
    %v1536 = vpop.xlane.xlu0 %1535
    %v1537 = vsel %vm118, %v1534, 0.0
    %1538 = vadd.xlane.f32.xlu0 %v1537
    %v1539 = vpop.xlane.xlu0 %1538
    %v1540 = vsel %vm118, %v1539, 0.0
    %v1541 = vadd.f32 %v1536, %v1540
    %v1542 = vrot.slane %v1541, 4
    %v1543 = vadd.f32 %v1541, %v1542
    %v1544 = vrot.slane %v1543, 2
    %v1545 = vadd.f32 %v1543, %v1544
    %v1546 = vrot.slane %v1545, 1
    %v1547 = vadd.f32 %v1545, %v1546
    %v1548 = vmul.f32 %v1533, %v1533
    %v1549 = vmul.f32 %v1534, %v1534
    %1550 = vadd.xlane.f32.xlu0 %v1548
    %v1551 = vpop.xlane.xlu0 %1550
    %v1552 = vsel %vm118, %v1549, 0.0
    %1553 = vadd.xlane.f32.xlu0 %v1552
    %v1554 = vpop.xlane.xlu0 %1553
    %v1555 = vsel %vm118, %v1554, 0.0
    %v1556 = vadd.f32 %v1551, %v1555
    %v1557 = vrot.slane %v1556, 4
    %v1558 = vadd.f32 %v1556, %v1557
    %v1559 = vrot.slane %v1558, 2
    %v1560 = vadd.f32 %v1558, %v1559
    %v1561 = vrot.slane %v1560, 1
    %v1562 = vadd.f32 %v1560, %v1561
    %v1563 = vmul.f32 %v1547, 0.0025510204
    %v1564 = vmul.f32 %v1562, 0.0025510204
    %v1565 = vmul.f32 %v1563, %v1563
    %v1566 = vsub.f32 %v1564, %v1565
    %v1567 = vadd.f32 %v1566, 1e-05
    %v1568 = vrsqrt.pop %v1567
    %v1569 = vmul.f32 %v1568, %v1567
    %v1570 = vmul.f32 %v1569, %v1568
    %v1571 = vmul.f32 0.5, %v1570
    %v1572 = vsub.f32 1.5, %v1571
    %v1573 = vmul.f32 %v1568, %v1572
    %vm1574 = vweird.f32 %v1567
    %vm1575 = vweird.f32 %v1568
    %vm1576 = vmor %vm1574, %vm1575
    %v1577 = vsel %vm1576, %v1568, %v1573
    %v1578 = vstv %s1531
    %v1579 = vmul.f32 %v1578, %v1577
    %v1580 = vmul.f32 %v1563, %v1579
    %v1581 = vstv %s1532
    %v1582 = vsub.f32 %v1581, %v1580
    %v1583 = vmul.f32 %v1448, %v1579
    %v1584 = vmul.f32 %v1449, %v1579
    %v1585 = vadd.f32 %v1583, %v1582
    %v1586 = vadd.f32 %v1584, %v1582
    %v1587 = vmax.f32 %v1585, 0.0
    %v1588 = vmax.f32 %v1586, 0.0
    %v1591 = vrot.slane %v1587, 7
    %v1592 = vrot.slane %v1588, 7
    %v1593 = vsel %vm943, %v1591, %v1592
    %v1596 = vrot.slane %v1588, 6
    %v1598 = vsel %vm943, %v1587, %v1591
    %v1599 = vsel %vm91, %v1593, %v1596
    %1600 = vrot.lane.b32.xlu0 %v1598, 1
    %v1601 = vpop.permute.xlu0 %1600
    %1602 = vrot.lane.b32.xlu0 %v1599, 1
    %v1603 = vpop.permute.xlu0 %1602
    %1604 = vrot.lane.b32.xlu0 %v1598, 2
    %v1605 = vpop.permute.xlu0 %1604
    %1606 = vrot.lane.b32.xlu0 %v1599, 2
    %v1607 = vpop.permute.xlu0 %1606
    %v1608 = vsel %vm65, %v1605, %v1601
    %v1609 = vsel %vm65, %v1607, %v1603
    %v1610 = vsel %vm62, %v1598, %v1608
    %v1611 = vsel %vm62, %v1599, %v1609
    %s1612 = sld [smem:[#allocation6 + $0x78]]
    %v1613 = vstv %s1612
    %v1614 = vmul.f32 %v1529, %v1613
    %v1615 = vmul.f32 %v1530, %v1613
    %s1616 = sld [smem:[#allocation6 + $0x79]]
    %v1617 = vstv %s1616
    %v1618 = vmul.f32 %v1610, %v1617
    %v1619 = vmul.f32 %v1611, %v1617
    %v1620 = vadd.f32 %v1614, %v1618
    %v1621 = vadd.f32 %v1615, %v1619
    %s1622 = sld [smem:[#allocation6 + $0x7e]]
    %v1623 = vstv %s1622
    %v1624 = vadd.f32 %v1620, %v1623
    %v1625 = vadd.f32 %v1621, %v1623
    %s1626 = sld [smem:[#allocation6 + $0x7a]]
    %v1627 = vstv %s1626
    %v1628 = vmul.f32 %v1529, %v1627
    %v1629 = vmul.f32 %v1530, %v1627
    %s1630 = sld [smem:[#allocation6 + $0x7b]]
    %v1631 = vstv %s1630
    %v1632 = vmul.f32 %v1610, %v1631
    %v1633 = vmul.f32 %v1611, %v1631
    %v1634 = vadd.f32 %v1628, %v1632
    %v1635 = vadd.f32 %v1629, %v1633
    %s1636 = sld [smem:[#allocation6 + $0x7f]]
    %v1637 = vstv %s1636
    %v1638 = vadd.f32 %v1634, %v1637
    %v1639 = vadd.f32 %v1635, %v1637
    %s1640 = sld [smem:[#allocation6 + $0x7c]]
    %v1641 = vstv %s1640
    %v1642 = vmul.f32 %v1529, %v1641
    %v1643 = vmul.f32 %v1530, %v1641
    %s1644 = sld [smem:[#allocation6 + $0x7d]]
    %v1645 = vstv %s1644
    %v1646 = vmul.f32 %v1610, %v1645
    %v1647 = vmul.f32 %v1611, %v1645
    %v1648 = vadd.f32 %v1642, %v1646
    %v1649 = vadd.f32 %v1643, %v1647
    %s1650 = sld [smem:[#allocation6 + $0x80]]
    %v1651 = vstv %s1650
    %v1652 = vadd.f32 %v1648, %v1651
    %v1653 = vadd.f32 %v1649, %v1651
    %1654 = vst [vmem:[#allocation7] sm:$0xff] %v1624
    %1655 = vst [vmem:[#allocation7 + $0x8] sm:$0xff] %v1638
    %1656 = vst [vmem:[#allocation7 + $0x10] sm:$0xff] %v1652
    %1657 = vst [vmem:[#allocation7 + $0x18] sm:$0xff] %v1625
    %1658 = vst [vmem:[#allocation7 + $0x20] sm:$0xff] %v1639
    %1659 = vst [vmem:[#allocation7 + $0x28] sm:$0xff] %v1653
    // Predicated region
    $region18: #{tpu_custom_call.1} parent=1 // pred_check
      _
    $region19: #{tpu_custom_call.1} parent=1 // pred_check_branch
      %1661 = sbr.rel (0) target = $region21
    $region20: #{tpu_custom_call.1} parent=1 // pred_region
      %1663 = vsyncadd [#allocation4], 0
      %s1664 = sshll.u32 [#allocation7], 4
      %s1665 = int_to_ptr.vmem [resolvable:$true] %s1664
      %s1666 = sshll.u32 %s2, 4
      %s1667 = int_to_ptr.hbm [resolvable:$true] %s1666
      %1672 = dma.vmem_to_hbm [thread:$0]  %s1665, 768, %s1667, [#allocation4], 384, 384, 24
    $region21: #{tpu_custom_call.1} parent=1 // pred_fallthru
      _
    // Predicated region
    $region22: #{tpu_custom_call.1} parent=1 // pred_check
      _
    $region23: #{tpu_custom_call.1} parent=1 // pred_check_branch
      %1674 = sbr.rel (0) target = $region25
    $region24: #{tpu_custom_call.1} parent=1 // pred_region
      %1676 = dma.done [#allocation4], 768
    $region25: #{tpu_custom_call.1} parent=1 // pred_fallthru
      _
    %1677 = vsyncpa [#allocation3], 1
    %1678 = vsyncpa [#allocation4], 1
    %1679 = vsyncpa [#allocation5], 1

</llo_original>
